<compile_context>
chip_gen: v6e
topology: v6e:2x2x1
jax: 0.10.0
libtpu: 0.0.40
codegen_flags: <defaults>
</compile_context>

<pallas_src>
import functools

import jax
import jax.numpy as jnp
from jax import lax
from jax.experimental import pallas as pl
from jax.experimental.pallas import tpu as pltpu

KERNEL_SIZE = 7
PAD = KERNEL_SIZE // 2


def _spatial_attention_kernel(x_ref, w_ref, o_ref, sum_ref, max_ref, pad_ref,
                              *, C, H, W, c_chunk):
    """One (batch b, channel-chunk c) grid step.

    x_ref   : (1, c_chunk, H, W) input tile (native dtype).
    w_ref   : (2*7*7,) f32 conv weights in SMEM, flat [ci, kh, kw] order.
    o_ref   : (1, 1, H, W) output tile, written only on the last chunk.
    sum_ref : (H, W) f32 running channel sum (persists across c steps).
    max_ref : (H, W) f32 running channel max (persists across c steps).
    pad_ref : (2, H+2*PAD, W+2*PAD) f32 zero-padded conv-input scratch.
    """
    c = pl.program_id(1)
    nc = pl.num_programs(1)

    x = x_ref[0].astype(jnp.float32)                      # (c_chunk, H, W)

    if C % c_chunk != 0:
        # Ragged last chunk: rows past C contain unspecified data; mask them.
        ch = lax.broadcasted_iota(jnp.int32, (c_chunk, 1, 1), 0)
        valid = ch < (C - c * c_chunk)
        x_sum_in = jnp.where(valid, x, 0.0)
        x_max_in = jnp.where(valid, x, -jnp.inf)
    else:
        x_sum_in = x
        x_max_in = x

    part_sum = jnp.sum(x_sum_in, axis=0)                  # (H, W)
    part_max = jnp.max(x_max_in, axis=0)                  # (H, W)

    @pl.when(c == 0)
    def _init():
        # Initialize with the first partial: saves a fill + add/max pass.
        sum_ref[...] = part_sum
        max_ref[...] = part_max

    @pl.when(c > 0)
    def _accumulate():
        sum_ref[...] = sum_ref[...] + part_sum
        max_ref[...] = jnp.maximum(max_ref[...], part_max)

    @pl.when(c == nc - 1)
    def _finalize():
        # Write the (avg, max) maps into a zero-padded 2-D VMEM scratch so
        # every conv tap below is a static-offset window load from the ref
        # (no lane rotates, no column masks, full sublane occupancy).
        pad_ref[...] = jnp.zeros_like(pad_ref)
        pad_ref[0, PAD:PAD + H, PAD:PAD + W] = sum_ref[...] * jnp.float32(1.0 / C)
        pad_ref[1, PAD:PAD + H, PAD:PAD + W] = max_ref[...]

        acc = jnp.zeros((H, W), jnp.float32)
        for ci in range(2):
            for kh in range(KERNEL_SIZE):
                for kw in range(KERNEL_SIZE):
                    wt = w_ref[ci * KERNEL_SIZE * KERNEL_SIZE
                               + kh * KERNEL_SIZE + kw]
                    acc = acc + pad_ref[ci, kh:kh + H, kw:kw + W] * wt

        o_ref[0, 0] = jax.nn.sigmoid(acc).astype(o_ref.dtype)


def _vmem_params():
    """(per-input-block budget bytes, scoped vmem_limit_bytes), per generation."""
    try:
        cap = pltpu.get_tpu_info().vmem_capacity_bytes
    except Exception:
        cap = 64 * 1024 * 1024                      # unknown -> assume smallest
    if cap >= 128 * 1024 * 1024:                    # v5e / v6e: 128 MiB physical
        return 8 * 1024 * 1024, 64 * 1024 * 1024
    # v7x: 64 MiB per TensorCore -> keep total residency well under ~48 MiB.
    return 6 * 1024 * 1024, 40 * 1024 * 1024


def _pick_c_chunk(C, H, W, itemsize, budget_bytes):
    """Largest channel chunk whose VMEM-resident block stays within budget,
    accounting for (sublane, lane) padding of each (H, W) slab.  The channel
    axis is a leading block dim here, so no dtype sublane quantization needed.
    """
    sublane = 8 * max(1, 4 // itemsize)             # 8 f32 / 16 bf16 / 32 int8
    padded_rows = -(-H // sublane) * sublane
    padded_cols = -(-W // 128) * 128
    per_channel = padded_rows * padded_cols * itemsize
    # TODO(synk): when a single padded channel slab exceeds the budget
    # (very large H*W), tile the spatial map with a 3-row halo as well.
    return int(max(1, min(C, budget_bytes // max(1, per_channel))))


def spatial_attention(x, conv_weight):
    """x: (B, C, H, W); conv_weight: (1, 2, 7, 7) (PyTorch OIHW).

    Returns (B, 1, H, W) in x.dtype.
    """
    B, C, H, W = x.shape
    itemsize = jnp.dtype(x.dtype).itemsize

    budget, vmem_limit = _vmem_params()
    c_chunk = _pick_c_chunk(C, H, W, itemsize, budget)
    nc = -(-C // c_chunk)

    w_flat = conv_weight.reshape(2 * KERNEL_SIZE * KERNEL_SIZE).astype(jnp.float32)

    kernel = functools.partial(_spatial_attention_kernel,
                               C=C, H=H, W=W, c_chunk=c_chunk)

    cost = pl.CostEstimate(
        flops=B * H * W * (2 * C + 4 * KERNEL_SIZE * KERNEL_SIZE),
        transcendentals=B * H * W,
        bytes_accessed=B * C * H * W * itemsize + B * H * W * itemsize,
    )

    # TODO(synk): for B < 2 on v7x (2 TensorCores/chip) add a second parallel
    # grid axis by splitting H into halo'd spatial tiles so both cores work.
    out = pl.pallas_call(
        kernel,
        out_shape=jax.ShapeDtypeStruct((B, 1, H, W), x.dtype),
        grid=(B, nc),
        in_specs=[
            pl.BlockSpec((1, c_chunk, H, W), lambda b, c: (b, c, 0, 0)),
            pl.BlockSpec(memory_space=pltpu.MemorySpace.SMEM),
        ],
        out_specs=pl.BlockSpec((1, 1, H, W), lambda b, c: (b, 0, 0, 0)),
        scratch_shapes=[
            pltpu.VMEM((H, W), jnp.float32),                          # channel sum
            pltpu.VMEM((H, W), jnp.float32),                          # channel max
            pltpu.VMEM((2, H + 2 * PAD, W + 2 * PAD), jnp.float32),   # padded conv in
        ],
        compiler_params=pltpu.CompilerParams(
            dimension_semantics=("parallel", "arbitrary"),
            vmem_limit_bytes=vmem_limit),
        cost_estimate=cost,
    )(x, w_flat)
    return out


def spatial_attention_reference(x, conv_weight):
    """Pure-JAX reference mirroring the PyTorch forward (for verification)."""
    xf = x.astype(jnp.float32)
    avg = jnp.mean(xf, axis=1, keepdims=True)
    mx = jnp.max(xf, axis=1, keepdims=True)
    feat = jnp.concatenate([avg, mx], axis=1)
    out = lax.conv_general_dilated(
        feat, conv_weight.astype(jnp.float32), window_strides=(1, 1),
        padding=((PAD, PAD), (PAD, PAD)),
        dimension_numbers=("NCHW", "OIHW", "NCHW"),
        precision=lax.Precision.HIGHEST)
    return jax.nn.sigmoid(out).astype(x.dtype)


if __name__ == "__main__":
    key = jax.random.PRNGKey(0)
    kx, kw = jax.random.split(key)

    B, C, H, W = 2, 4, 16, 16
    x = jax.random.normal(kx, (B, C, H, W), dtype=jnp.float32)

    # Deterministic init for Conv2d(2, 1, 7, bias=False): OIHW = (1, 2, 7, 7)
    fan_in = 2 * KERNEL_SIZE * KERNEL_SIZE
    conv_w = jax.random.normal(kw, (1, 2, KERNEL_SIZE, KERNEL_SIZE),
                               dtype=jnp.float32) * (1.0 / fan_in) ** 0.5

    out = jax.block_until_ready(spatial_attention(x, conv_w))
    ref = spatial_attention_reference(x, conv_w)

    assert out.shape == (B, 1, H, W), out.shape
    max_err = float(jnp.max(jnp.abs(out.astype(jnp.float32) - ref.astype(jnp.float32))))
    assert max_err < 2e-3, f"mismatch vs JAX reference: {max_err}"

    print("KERNEL_OK")
</pallas_src>

<mosaic_0001>
module attributes {stable_mosaic.version = 11 : i64} {
  func.func @_spatial_attention_kernel(%arg0: i32, %arg1: i32, %arg2: memref<1x4x16x16xf32, #tpu.memory_space<vmem>>, %arg3: memref<98xf32, #tpu.memory_space<smem>>, %arg4: memref<1x1x16x16xf32, #tpu.memory_space<vmem>>, %arg5: memref<16x16xf32, #tpu.memory_space<vmem>>, %arg6: memref<16x16xf32, #tpu.memory_space<vmem>>, %arg7: memref<2x22x22xf32, #tpu.memory_space<vmem>>) attributes {dimension_semantics = [#tpu.dimension_semantics<parallel>, #tpu.dimension_semantics<arbitrary>], iteration_bounds = array<i64: 2, 1>, scalar_prefetch = 0 : i64, scratch_operands = 3 : i64, tpu.core_type = #tpu.core_type<tc>, window_params = [{transform_indices = @transform_0, window_bounds = array<i64: 1, 4, 16, 16>}, {transform_indices = @transform_1, window_bounds = array<i64: 98>}, {transform_indices = @transform_2, window_bounds = array<i64: 1, 1, 16, 16>}]} {
    %c0 = arith.constant 0 : index
    %c0_0 = arith.constant 0 : index
    %c0_1 = arith.constant 0 : index
    %c0_2 = arith.constant 0 : index
    %0 = vector.load %arg2[%c0, %c0_0, %c0_1, %c0_2] : memref<1x4x16x16xf32, #tpu.memory_space<vmem>>, vector<1x4x16x16xf32>
    %1 = vector.shape_cast %0 : vector<1x4x16x16xf32> to vector<4x16x16xf32>
    %cst = arith.constant dense<0.000000e+00> : vector<16x16xf32>
    %2 = vector.multi_reduction <add>, %1, %cst [0] : vector<4x16x16xf32> to vector<16x16xf32>
    %cst_3 = arith.constant dense<0xFF800000> : vector<16x16xf32>
    %3 = vector.multi_reduction <maximumf>, %1, %cst_3 [0] : vector<4x16x16xf32> to vector<16x16xf32>
    %c0_i32 = arith.constant 0 : i32
    %4 = arith.cmpi eq, %arg1, %c0_i32 : i32
    %5 = arith.extui %4 : i1 to i32
    %c0_i32_4 = arith.constant 0 : i32
    %6 = arith.cmpi ne, %5, %c0_i32_4 : i32
    scf.if %6 {
      %c0_9 = arith.constant 0 : index
      %c0_10 = arith.constant 0 : index
      %13 = vector.load %arg5[%c0_9, %c0_10] : memref<16x16xf32, #tpu.memory_space<vmem>>, vector<16x16xf32>
      tpu.vector_store %arg5[%c0_9, %c0_10], %2 {strides = array<i32>} : memref<16x16xf32, #tpu.memory_space<vmem>>, vector<16x16xf32>,
      %c0_11 = arith.constant 0 : index
      %c0_12 = arith.constant 0 : index
      %14 = vector.load %arg6[%c0_11, %c0_12] : memref<16x16xf32, #tpu.memory_space<vmem>>, vector<16x16xf32>
      tpu.vector_store %arg6[%c0_11, %c0_12], %3 {strides = array<i32>} : memref<16x16xf32, #tpu.memory_space<vmem>>, vector<16x16xf32>,
    } else {
    }
    %c0_i32_5 = arith.constant 0 : i32
    %7 = arith.cmpi sgt, %arg1, %c0_i32_5 : i32
    %8 = arith.extui %7 : i1 to i32
    %c0_i32_6 = arith.constant 0 : i32
    %9 = arith.cmpi ne, %8, %c0_i32_6 : i32
    scf.if %9 {
      %c0_9 = arith.constant 0 : index
      %c0_10 = arith.constant 0 : index
      %13 = vector.load %arg5[%c0_9, %c0_10] : memref<16x16xf32, #tpu.memory_space<vmem>>, vector<16x16xf32>
      %14 = arith.addf %13, %2 : vector<16x16xf32>
      %c0_11 = arith.constant 0 : index
      %c0_12 = arith.constant 0 : index
      %15 = vector.load %arg5[%c0_11, %c0_12] : memref<16x16xf32, #tpu.memory_space<vmem>>, vector<16x16xf32>
      tpu.vector_store %arg5[%c0_11, %c0_12], %14 {strides = array<i32>} : memref<16x16xf32, #tpu.memory_space<vmem>>, vector<16x16xf32>,
      %c0_13 = arith.constant 0 : index
      %c0_14 = arith.constant 0 : index
      %16 = vector.load %arg6[%c0_13, %c0_14] : memref<16x16xf32, #tpu.memory_space<vmem>>, vector<16x16xf32>
      %17 = arith.maximumf %16, %3 : vector<16x16xf32>
      %c0_15 = arith.constant 0 : index
      %c0_16 = arith.constant 0 : index
      %18 = vector.load %arg6[%c0_15, %c0_16] : memref<16x16xf32, #tpu.memory_space<vmem>>, vector<16x16xf32>
      tpu.vector_store %arg6[%c0_15, %c0_16], %17 {strides = array<i32>} : memref<16x16xf32, #tpu.memory_space<vmem>>, vector<16x16xf32>,
    } else {
    }
    %c0_i32_7 = arith.constant 0 : i32
    %10 = arith.cmpi eq, %arg1, %c0_i32_7 : i32
    %11 = arith.extui %10 : i1 to i32
    %c0_i32_8 = arith.constant 0 : i32
    %12 = arith.cmpi ne, %11, %c0_i32_8 : i32
    scf.if %12 {
      %cst_9 = arith.constant 0.000000e+00 : f32
      %13 = vector.broadcast %cst_9 : f32 to vector<2x22x22xf32>
      %c0_10 = arith.constant 0 : index
      %c0_11 = arith.constant 0 : index
      %c0_12 = arith.constant 0 : index
      %14 = vector.load %arg7[%c0_10, %c0_11, %c0_12] : memref<2x22x22xf32, #tpu.memory_space<vmem>>, vector<2x22x22xf32>
      tpu.vector_store %arg7[%c0_10, %c0_11, %c0_12], %13 {strides = array<i32>} : memref<2x22x22xf32, #tpu.memory_space<vmem>>, vector<2x22x22xf32>,
      %c0_13 = arith.constant 0 : index
      %c0_14 = arith.constant 0 : index
      %15 = vector.load %arg5[%c0_13, %c0_14] : memref<16x16xf32, #tpu.memory_space<vmem>>, vector<16x16xf32>
      %cst_15 = arith.constant 2.500000e-01 : f32
      %16 = vector.broadcast %cst_15 : f32 to vector<16x16xf32>
      %17 = arith.mulf %15, %16 : vector<16x16xf32>
      %c0_16 = arith.constant 0 : index
      %c3 = arith.constant 3 : index
      %c3_17 = arith.constant 3 : index
      %18 = vector.load %arg7[%c0_16, %c3, %c3_17] : memref<2x22x22xf32, #tpu.memory_space<vmem>>, vector<1x16x16xf32>
      %19 = vector.shape_cast %18 : vector<1x16x16xf32> to vector<16x16xf32>
      %20 = vector.shape_cast %17 : vector<16x16xf32> to vector<1x16x16xf32>
      tpu.vector_store %arg7[%c0_16, %c3, %c3_17], %20 {strides = array<i32>} : memref<2x22x22xf32, #tpu.memory_space<vmem>>, vector<1x16x16xf32>,
      %c0_18 = arith.constant 0 : index
      %c0_19 = arith.constant 0 : index
      %21 = vector.load %arg6[%c0_18, %c0_19] : memref<16x16xf32, #tpu.memory_space<vmem>>, vector<16x16xf32>
      %c1 = arith.constant 1 : index
      %c3_20 = arith.constant 3 : index
      %c3_21 = arith.constant 3 : index
      %22 = vector.load %arg7[%c1, %c3_20, %c3_21] : memref<2x22x22xf32, #tpu.memory_space<vmem>>, vector<1x16x16xf32>
      %23 = vector.shape_cast %22 : vector<1x16x16xf32> to vector<16x16xf32>
      %24 = vector.shape_cast %21 : vector<16x16xf32> to vector<1x16x16xf32>
      tpu.vector_store %arg7[%c1, %c3_20, %c3_21], %24 {strides = array<i32>} : memref<2x22x22xf32, #tpu.memory_space<vmem>>, vector<1x16x16xf32>,
      %cst_22 = arith.constant 0.000000e+00 : f32
      %25 = vector.broadcast %cst_22 : f32 to vector<16x16xf32>
      %c0_23 = arith.constant 0 : index
      %26 = memref.load %arg3[%c0_23] : memref<98xf32, #tpu.memory_space<smem>>
      %c0_24 = arith.constant 0 : index
      %c0_25 = arith.constant 0 : index
      %c0_26 = arith.constant 0 : index
      %27 = vector.load %arg7[%c0_24, %c0_25, %c0_26] : memref<2x22x22xf32, #tpu.memory_space<vmem>>, vector<1x16x16xf32>
      %28 = vector.shape_cast %27 : vector<1x16x16xf32> to vector<16x16xf32>
      %29 = vector.broadcast %26 : f32 to vector<16x16xf32>
      %30 = arith.mulf %28, %29 : vector<16x16xf32>
      %31 = arith.addf %25, %30 : vector<16x16xf32>
      %c1_27 = arith.constant 1 : index
      %32 = memref.load %arg3[%c1_27] : memref<98xf32, #tpu.memory_space<smem>>
      %c0_28 = arith.constant 0 : index
      %c0_29 = arith.constant 0 : index
      %c1_30 = arith.constant 1 : index
      %33 = vector.load %arg7[%c0_28, %c0_29, %c1_30] : memref<2x22x22xf32, #tpu.memory_space<vmem>>, vector<1x16x16xf32>
      %34 = vector.shape_cast %33 : vector<1x16x16xf32> to vector<16x16xf32>
      %35 = vector.broadcast %32 : f32 to vector<16x16xf32>
      %36 = arith.mulf %34, %35 : vector<16x16xf32>
      %37 = arith.addf %31, %36 : vector<16x16xf32>
      %c2 = arith.constant 2 : index
      %38 = memref.load %arg3[%c2] : memref<98xf32, #tpu.memory_space<smem>>
      %c0_31 = arith.constant 0 : index
      %c0_32 = arith.constant 0 : index
      %c2_33 = arith.constant 2 : index
      %39 = vector.load %arg7[%c0_31, %c0_32, %c2_33] : memref<2x22x22xf32, #tpu.memory_space<vmem>>, vector<1x16x16xf32>
      %40 = vector.shape_cast %39 : vector<1x16x16xf32> to vector<16x16xf32>
      %41 = vector.broadcast %38 : f32 to vector<16x16xf32>
      %42 = arith.mulf %40, %41 : vector<16x16xf32>
      %43 = arith.addf %37, %42 : vector<16x16xf32>
      %c3_34 = arith.constant 3 : index
      %44 = memref.load %arg3[%c3_34] : memref<98xf32, #tpu.memory_space<smem>>
      %c0_35 = arith.constant 0 : index
      %c0_36 = arith.constant 0 : index
      %c3_37 = arith.constant 3 : index
      %45 = vector.load %arg7[%c0_35, %c0_36, %c3_37] : memref<2x22x22xf32, #tpu.memory_space<vmem>>, vector<1x16x16xf32>
      %46 = vector.shape_cast %45 : vector<1x16x16xf32> to vector<16x16xf32>
      %47 = vector.broadcast %44 : f32 to vector<16x16xf32>
      %48 = arith.mulf %46, %47 : vector<16x16xf32>
      %49 = arith.addf %43, %48 : vector<16x16xf32>
      %c4 = arith.constant 4 : index
      %50 = memref.load %arg3[%c4] : memref<98xf32, #tpu.memory_space<smem>>
      %c0_38 = arith.constant 0 : index
      %c0_39 = arith.constant 0 : index
      %c4_40 = arith.constant 4 : index
      %51 = vector.load %arg7[%c0_38, %c0_39, %c4_40] : memref<2x22x22xf32, #tpu.memory_space<vmem>>, vector<1x16x16xf32>
      %52 = vector.shape_cast %51 : vector<1x16x16xf32> to vector<16x16xf32>
      %53 = vector.broadcast %50 : f32 to vector<16x16xf32>
      %54 = arith.mulf %52, %53 : vector<16x16xf32>
      %55 = arith.addf %49, %54 : vector<16x16xf32>
      %c5 = arith.constant 5 : index
      %56 = memref.load %arg3[%c5] : memref<98xf32, #tpu.memory_space<smem>>
      %c0_41 = arith.constant 0 : index
      %c0_42 = arith.constant 0 : index
      %c5_43 = arith.constant 5 : index
      %57 = vector.load %arg7[%c0_41, %c0_42, %c5_43] : memref<2x22x22xf32, #tpu.memory_space<vmem>>, vector<1x16x16xf32>
      %58 = vector.shape_cast %57 : vector<1x16x16xf32> to vector<16x16xf32>
      %59 = vector.broadcast %56 : f32 to vector<16x16xf32>
      %60 = arith.mulf %58, %59 : vector<16x16xf32>
      %61 = arith.addf %55, %60 : vector<16x16xf32>
      %c6 = arith.constant 6 : index
      %62 = memref.load %arg3[%c6] : memref<98xf32, #tpu.memory_space<smem>>
      %c0_44 = arith.constant 0 : index
      %c0_45 = arith.constant 0 : index
      %c6_46 = arith.constant 6 : index
      %63 = vector.load %arg7[%c0_44, %c0_45, %c6_46] : memref<2x22x22xf32, #tpu.memory_space<vmem>>, vector<1x16x16xf32>
      %64 = vector.shape_cast %63 : vector<1x16x16xf32> to vector<16x16xf32>
      %65 = vector.broadcast %62 : f32 to vector<16x16xf32>
      %66 = arith.mulf %64, %65 : vector<16x16xf32>
      %67 = arith.addf %61, %66 : vector<16x16xf32>
      %c7 = arith.constant 7 : index
      %68 = memref.load %arg3[%c7] : memref<98xf32, #tpu.memory_space<smem>>
      %c0_47 = arith.constant 0 : index
      %c1_48 = arith.constant 1 : index
      %c0_49 = arith.constant 0 : index
      %69 = vector.load %arg7[%c0_47, %c1_48, %c0_49] : memref<2x22x22xf32, #tpu.memory_space<vmem>>, vector<1x16x16xf32>
      %70 = vector.shape_cast %69 : vector<1x16x16xf32> to vector<16x16xf32>
      %71 = vector.broadcast %68 : f32 to vector<16x16xf32>
      %72 = arith.mulf %70, %71 : vector<16x16xf32>
      %73 = arith.addf %67, %72 : vector<16x16xf32>
      %c8 = arith.constant 8 : index
      %74 = memref.load %arg3[%c8] : memref<98xf32, #tpu.memory_space<smem>>
      %c0_50 = arith.constant 0 : index
      %c1_51 = arith.constant 1 : index
      %c1_52 = arith.constant 1 : index
      %75 = vector.load %arg7[%c0_50, %c1_51, %c1_52] : memref<2x22x22xf32, #tpu.memory_space<vmem>>, vector<1x16x16xf32>
      %76 = vector.shape_cast %75 : vector<1x16x16xf32> to vector<16x16xf32>
      %77 = vector.broadcast %74 : f32 to vector<16x16xf32>
      %78 = arith.mulf %76, %77 : vector<16x16xf32>
      %79 = arith.addf %73, %78 : vector<16x16xf32>
      %c9 = arith.constant 9 : index
      %80 = memref.load %arg3[%c9] : memref<98xf32, #tpu.memory_space<smem>>
      %c0_53 = arith.constant 0 : index
      %c1_54 = arith.constant 1 : index
      %c2_55 = arith.constant 2 : index
      %81 = vector.load %arg7[%c0_53, %c1_54, %c2_55] : memref<2x22x22xf32, #tpu.memory_space<vmem>>, vector<1x16x16xf32>
      %82 = vector.shape_cast %81 : vector<1x16x16xf32> to vector<16x16xf32>
      %83 = vector.broadcast %80 : f32 to vector<16x16xf32>
      %84 = arith.mulf %82, %83 : vector<16x16xf32>
      %85 = arith.addf %79, %84 : vector<16x16xf32>
      %c10 = arith.constant 10 : index
      %86 = memref.load %arg3[%c10] : memref<98xf32, #tpu.memory_space<smem>>
      %c0_56 = arith.constant 0 : index
      %c1_57 = arith.constant 1 : index
      %c3_58 = arith.constant 3 : index
      %87 = vector.load %arg7[%c0_56, %c1_57, %c3_58] : memref<2x22x22xf32, #tpu.memory_space<vmem>>, vector<1x16x16xf32>
      %88 = vector.shape_cast %87 : vector<1x16x16xf32> to vector<16x16xf32>
      %89 = vector.broadcast %86 : f32 to vector<16x16xf32>
      %90 = arith.mulf %88, %89 : vector<16x16xf32>
      %91 = arith.addf %85, %90 : vector<16x16xf32>
      %c11 = arith.constant 11 : index
      %92 = memref.load %arg3[%c11] : memref<98xf32, #tpu.memory_space<smem>>
      %c0_59 = arith.constant 0 : index
      %c1_60 = arith.constant 1 : index
      %c4_61 = arith.constant 4 : index
      %93 = vector.load %arg7[%c0_59, %c1_60, %c4_61] : memref<2x22x22xf32, #tpu.memory_space<vmem>>, vector<1x16x16xf32>
      %94 = vector.shape_cast %93 : vector<1x16x16xf32> to vector<16x16xf32>
      %95 = vector.broadcast %92 : f32 to vector<16x16xf32>
      %96 = arith.mulf %94, %95 : vector<16x16xf32>
      %97 = arith.addf %91, %96 : vector<16x16xf32>
      %c12 = arith.constant 12 : index
      %98 = memref.load %arg3[%c12] : memref<98xf32, #tpu.memory_space<smem>>
      %c0_62 = arith.constant 0 : index
      %c1_63 = arith.constant 1 : index
      %c5_64 = arith.constant 5 : index
      %99 = vector.load %arg7[%c0_62, %c1_63, %c5_64] : memref<2x22x22xf32, #tpu.memory_space<vmem>>, vector<1x16x16xf32>
      %100 = vector.shape_cast %99 : vector<1x16x16xf32> to vector<16x16xf32>
      %101 = vector.broadcast %98 : f32 to vector<16x16xf32>
      %102 = arith.mulf %100, %101 : vector<16x16xf32>
      %103 = arith.addf %97, %102 : vector<16x16xf32>
      %c13 = arith.constant 13 : index
      %104 = memref.load %arg3[%c13] : memref<98xf32, #tpu.memory_space<smem>>
      %c0_65 = arith.constant 0 : index
      %c1_66 = arith.constant 1 : index
      %c6_67 = arith.constant 6 : index
      %105 = vector.load %arg7[%c0_65, %c1_66, %c6_67] : memref<2x22x22xf32, #tpu.memory_space<vmem>>, vector<1x16x16xf32>
      %106 = vector.shape_cast %105 : vector<1x16x16xf32> to vector<16x16xf32>
      %107 = vector.broadcast %104 : f32 to vector<16x16xf32>
      %108 = arith.mulf %106, %107 : vector<16x16xf32>
      %109 = arith.addf %103, %108 : vector<16x16xf32>
      %c14 = arith.constant 14 : index
      %110 = memref.load %arg3[%c14] : memref<98xf32, #tpu.memory_space<smem>>
      %c0_68 = arith.constant 0 : index
      %c2_69 = arith.constant 2 : index
      %c0_70 = arith.constant 0 : index
      %111 = vector.load %arg7[%c0_68, %c2_69, %c0_70] : memref<2x22x22xf32, #tpu.memory_space<vmem>>, vector<1x16x16xf32>
      %112 = vector.shape_cast %111 : vector<1x16x16xf32> to vector<16x16xf32>
      %113 = vector.broadcast %110 : f32 to vector<16x16xf32>
      %114 = arith.mulf %112, %113 : vector<16x16xf32>
      %115 = arith.addf %109, %114 : vector<16x16xf32>
      %c15 = arith.constant 15 : index
      %116 = memref.load %arg3[%c15] : memref<98xf32, #tpu.memory_space<smem>>
      %c0_71 = arith.constant 0 : index
      %c2_72 = arith.constant 2 : index
      %c1_73 = arith.constant 1 : index
      %117 = vector.load %arg7[%c0_71, %c2_72, %c1_73] : memref<2x22x22xf32, #tpu.memory_space<vmem>>, vector<1x16x16xf32>
      %118 = vector.shape_cast %117 : vector<1x16x16xf32> to vector<16x16xf32>
      %119 = vector.broadcast %116 : f32 to vector<16x16xf32>
      %120 = arith.mulf %118, %119 : vector<16x16xf32>
      %121 = arith.addf %115, %120 : vector<16x16xf32>
      %c16 = arith.constant 16 : index
      %122 = memref.load %arg3[%c16] : memref<98xf32, #tpu.memory_space<smem>>
      %c0_74 = arith.constant 0 : index
      %c2_75 = arith.constant 2 : index
      %c2_76 = arith.constant 2 : index
      %123 = vector.load %arg7[%c0_74, %c2_75, %c2_76] : memref<2x22x22xf32, #tpu.memory_space<vmem>>, vector<1x16x16xf32>
      %124 = vector.shape_cast %123 : vector<1x16x16xf32> to vector<16x16xf32>
      %125 = vector.broadcast %122 : f32 to vector<16x16xf32>
      %126 = arith.mulf %124, %125 : vector<16x16xf32>
      %127 = arith.addf %121, %126 : vector<16x16xf32>
      %c17 = arith.constant 17 : index
      %128 = memref.load %arg3[%c17] : memref<98xf32, #tpu.memory_space<smem>>
      %c0_77 = arith.constant 0 : index
      %c2_78 = arith.constant 2 : index
      %c3_79 = arith.constant 3 : index
      %129 = vector.load %arg7[%c0_77, %c2_78, %c3_79] : memref<2x22x22xf32, #tpu.memory_space<vmem>>, vector<1x16x16xf32>
      %130 = vector.shape_cast %129 : vector<1x16x16xf32> to vector<16x16xf32>
      %131 = vector.broadcast %128 : f32 to vector<16x16xf32>
      %132 = arith.mulf %130, %131 : vector<16x16xf32>
      %133 = arith.addf %127, %132 : vector<16x16xf32>
      %c18 = arith.constant 18 : index
      %134 = memref.load %arg3[%c18] : memref<98xf32, #tpu.memory_space<smem>>
      %c0_80 = arith.constant 0 : index
      %c2_81 = arith.constant 2 : index
      %c4_82 = arith.constant 4 : index
      %135 = vector.load %arg7[%c0_80, %c2_81, %c4_82] : memref<2x22x22xf32, #tpu.memory_space<vmem>>, vector<1x16x16xf32>
      %136 = vector.shape_cast %135 : vector<1x16x16xf32> to vector<16x16xf32>
      %137 = vector.broadcast %134 : f32 to vector<16x16xf32>
      %138 = arith.mulf %136, %137 : vector<16x16xf32>
      %139 = arith.addf %133, %138 : vector<16x16xf32>
      %c19 = arith.constant 19 : index
      %140 = memref.load %arg3[%c19] : memref<98xf32, #tpu.memory_space<smem>>
      %c0_83 = arith.constant 0 : index
      %c2_84 = arith.constant 2 : index
      %c5_85 = arith.constant 5 : index
      %141 = vector.load %arg7[%c0_83, %c2_84, %c5_85] : memref<2x22x22xf32, #tpu.memory_space<vmem>>, vector<1x16x16xf32>
      %142 = vector.shape_cast %141 : vector<1x16x16xf32> to vector<16x16xf32>
      %143 = vector.broadcast %140 : f32 to vector<16x16xf32>
      %144 = arith.mulf %142, %143 : vector<16x16xf32>
      %145 = arith.addf %139, %144 : vector<16x16xf32>
      %c20 = arith.constant 20 : index
      %146 = memref.load %arg3[%c20] : memref<98xf32, #tpu.memory_space<smem>>
      %c0_86 = arith.constant 0 : index
      %c2_87 = arith.constant 2 : index
      %c6_88 = arith.constant 6 : index
      %147 = vector.load %arg7[%c0_86, %c2_87, %c6_88] : memref<2x22x22xf32, #tpu.memory_space<vmem>>, vector<1x16x16xf32>
      %148 = vector.shape_cast %147 : vector<1x16x16xf32> to vector<16x16xf32>
      %149 = vector.broadcast %146 : f32 to vector<16x16xf32>
      %150 = arith.mulf %148, %149 : vector<16x16xf32>
      %151 = arith.addf %145, %150 : vector<16x16xf32>
      %c21 = arith.constant 21 : index
      %152 = memref.load %arg3[%c21] : memref<98xf32, #tpu.memory_space<smem>>
      %c0_89 = arith.constant 0 : index
      %c3_90 = arith.constant 3 : index
      %c0_91 = arith.constant 0 : index
      %153 = vector.load %arg7[%c0_89, %c3_90, %c0_91] : memref<2x22x22xf32, #tpu.memory_space<vmem>>, vector<1x16x16xf32>
      %154 = vector.shape_cast %153 : vector<1x16x16xf32> to vector<16x16xf32>
      %155 = vector.broadcast %152 : f32 to vector<16x16xf32>
      %156 = arith.mulf %154, %155 : vector<16x16xf32>
      %157 = arith.addf %151, %156 : vector<16x16xf32>
      %c22 = arith.constant 22 : index
      %158 = memref.load %arg3[%c22] : memref<98xf32, #tpu.memory_space<smem>>
      %c0_92 = arith.constant 0 : index
      %c3_93 = arith.constant 3 : index
      %c1_94 = arith.constant 1 : index
      %159 = vector.load %arg7[%c0_92, %c3_93, %c1_94] : memref<2x22x22xf32, #tpu.memory_space<vmem>>, vector<1x16x16xf32>
      %160 = vector.shape_cast %159 : vector<1x16x16xf32> to vector<16x16xf32>
      %161 = vector.broadcast %158 : f32 to vector<16x16xf32>
      %162 = arith.mulf %160, %161 : vector<16x16xf32>
      %163 = arith.addf %157, %162 : vector<16x16xf32>
      %c23 = arith.constant 23 : index
      %164 = memref.load %arg3[%c23] : memref<98xf32, #tpu.memory_space<smem>>
      %c0_95 = arith.constant 0 : index
      %c3_96 = arith.constant 3 : index
      %c2_97 = arith.constant 2 : index
      %165 = vector.load %arg7[%c0_95, %c3_96, %c2_97] : memref<2x22x22xf32, #tpu.memory_space<vmem>>, vector<1x16x16xf32>
      %166 = vector.shape_cast %165 : vector<1x16x16xf32> to vector<16x16xf32>
      %167 = vector.broadcast %164 : f32 to vector<16x16xf32>
      %168 = arith.mulf %166, %167 : vector<16x16xf32>
      %169 = arith.addf %163, %168 : vector<16x16xf32>
      %c24 = arith.constant 24 : index
      %170 = memref.load %arg3[%c24] : memref<98xf32, #tpu.memory_space<smem>>
      %c0_98 = arith.constant 0 : index
      %c3_99 = arith.constant 3 : index
      %c3_100 = arith.constant 3 : index
      %171 = vector.load %arg7[%c0_98, %c3_99, %c3_100] : memref<2x22x22xf32, #tpu.memory_space<vmem>>, vector<1x16x16xf32>
      %172 = vector.shape_cast %171 : vector<1x16x16xf32> to vector<16x16xf32>
      %173 = vector.broadcast %170 : f32 to vector<16x16xf32>
      %174 = arith.mulf %172, %173 : vector<16x16xf32>
      %175 = arith.addf %169, %174 : vector<16x16xf32>
      %c25 = arith.constant 25 : index
      %176 = memref.load %arg3[%c25] : memref<98xf32, #tpu.memory_space<smem>>
      %c0_101 = arith.constant 0 : index
      %c3_102 = arith.constant 3 : index
      %c4_103 = arith.constant 4 : index
      %177 = vector.load %arg7[%c0_101, %c3_102, %c4_103] : memref<2x22x22xf32, #tpu.memory_space<vmem>>, vector<1x16x16xf32>
      %178 = vector.shape_cast %177 : vector<1x16x16xf32> to vector<16x16xf32>
      %179 = vector.broadcast %176 : f32 to vector<16x16xf32>
      %180 = arith.mulf %178, %179 : vector<16x16xf32>
      %181 = arith.addf %175, %180 : vector<16x16xf32>
      %c26 = arith.constant 26 : index
      %182 = memref.load %arg3[%c26] : memref<98xf32, #tpu.memory_space<smem>>
      %c0_104 = arith.constant 0 : index
      %c3_105 = arith.constant 3 : index
      %c5_106 = arith.constant 5 : index
      %183 = vector.load %arg7[%c0_104, %c3_105, %c5_106] : memref<2x22x22xf32, #tpu.memory_space<vmem>>, vector<1x16x16xf32>
      %184 = vector.shape_cast %183 : vector<1x16x16xf32> to vector<16x16xf32>
      %185 = vector.broadcast %182 : f32 to vector<16x16xf32>
      %186 = arith.mulf %184, %185 : vector<16x16xf32>
      %187 = arith.addf %181, %186 : vector<16x16xf32>
      %c27 = arith.constant 27 : index
      %188 = memref.load %arg3[%c27] : memref<98xf32, #tpu.memory_space<smem>>
      %c0_107 = arith.constant 0 : index
      %c3_108 = arith.constant 3 : index
      %c6_109 = arith.constant 6 : index
      %189 = vector.load %arg7[%c0_107, %c3_108, %c6_109] : memref<2x22x22xf32, #tpu.memory_space<vmem>>, vector<1x16x16xf32>
      %190 = vector.shape_cast %189 : vector<1x16x16xf32> to vector<16x16xf32>
      %191 = vector.broadcast %188 : f32 to vector<16x16xf32>
      %192 = arith.mulf %190, %191 : vector<16x16xf32>
      %193 = arith.addf %187, %192 : vector<16x16xf32>
      %c28 = arith.constant 28 : index
      %194 = memref.load %arg3[%c28] : memref<98xf32, #tpu.memory_space<smem>>
      %c0_110 = arith.constant 0 : index
      %c4_111 = arith.constant 4 : index
      %c0_112 = arith.constant 0 : index
      %195 = vector.load %arg7[%c0_110, %c4_111, %c0_112] : memref<2x22x22xf32, #tpu.memory_space<vmem>>, vector<1x16x16xf32>
      %196 = vector.shape_cast %195 : vector<1x16x16xf32> to vector<16x16xf32>
      %197 = vector.broadcast %194 : f32 to vector<16x16xf32>
      %198 = arith.mulf %196, %197 : vector<16x16xf32>
      %199 = arith.addf %193, %198 : vector<16x16xf32>
      %c29 = arith.constant 29 : index
      %200 = memref.load %arg3[%c29] : memref<98xf32, #tpu.memory_space<smem>>
      %c0_113 = arith.constant 0 : index
      %c4_114 = arith.constant 4 : index
      %c1_115 = arith.constant 1 : index
      %201 = vector.load %arg7[%c0_113, %c4_114, %c1_115] : memref<2x22x22xf32, #tpu.memory_space<vmem>>, vector<1x16x16xf32>
      %202 = vector.shape_cast %201 : vector<1x16x16xf32> to vector<16x16xf32>
      %203 = vector.broadcast %200 : f32 to vector<16x16xf32>
      %204 = arith.mulf %202, %203 : vector<16x16xf32>
      %205 = arith.addf %199, %204 : vector<16x16xf32>
      %c30 = arith.constant 30 : index
      %206 = memref.load %arg3[%c30] : memref<98xf32, #tpu.memory_space<smem>>
      %c0_116 = arith.constant 0 : index
      %c4_117 = arith.constant 4 : index
      %c2_118 = arith.constant 2 : index
      %207 = vector.load %arg7[%c0_116, %c4_117, %c2_118] : memref<2x22x22xf32, #tpu.memory_space<vmem>>, vector<1x16x16xf32>
      %208 = vector.shape_cast %207 : vector<1x16x16xf32> to vector<16x16xf32>
      %209 = vector.broadcast %206 : f32 to vector<16x16xf32>
      %210 = arith.mulf %208, %209 : vector<16x16xf32>
      %211 = arith.addf %205, %210 : vector<16x16xf32>
      %c31 = arith.constant 31 : index
      %212 = memref.load %arg3[%c31] : memref<98xf32, #tpu.memory_space<smem>>
      %c0_119 = arith.constant 0 : index
      %c4_120 = arith.constant 4 : index
      %c3_121 = arith.constant 3 : index
      %213 = vector.load %arg7[%c0_119, %c4_120, %c3_121] : memref<2x22x22xf32, #tpu.memory_space<vmem>>, vector<1x16x16xf32>
      %214 = vector.shape_cast %213 : vector<1x16x16xf32> to vector<16x16xf32>
      %215 = vector.broadcast %212 : f32 to vector<16x16xf32>
      %216 = arith.mulf %214, %215 : vector<16x16xf32>
      %217 = arith.addf %211, %216 : vector<16x16xf32>
      %c32 = arith.constant 32 : index
      %218 = memref.load %arg3[%c32] : memref<98xf32, #tpu.memory_space<smem>>
      %c0_122 = arith.constant 0 : index
      %c4_123 = arith.constant 4 : index
      %c4_124 = arith.constant 4 : index
      %219 = vector.load %arg7[%c0_122, %c4_123, %c4_124] : memref<2x22x22xf32, #tpu.memory_space<vmem>>, vector<1x16x16xf32>
      %220 = vector.shape_cast %219 : vector<1x16x16xf32> to vector<16x16xf32>
      %221 = vector.broadcast %218 : f32 to vector<16x16xf32>
      %222 = arith.mulf %220, %221 : vector<16x16xf32>
      %223 = arith.addf %217, %222 : vector<16x16xf32>
      %c33 = arith.constant 33 : index
      %224 = memref.load %arg3[%c33] : memref<98xf32, #tpu.memory_space<smem>>
      %c0_125 = arith.constant 0 : index
      %c4_126 = arith.constant 4 : index
      %c5_127 = arith.constant 5 : index
      %225 = vector.load %arg7[%c0_125, %c4_126, %c5_127] : memref<2x22x22xf32, #tpu.memory_space<vmem>>, vector<1x16x16xf32>
      %226 = vector.shape_cast %225 : vector<1x16x16xf32> to vector<16x16xf32>
      %227 = vector.broadcast %224 : f32 to vector<16x16xf32>
      %228 = arith.mulf %226, %227 : vector<16x16xf32>
      %229 = arith.addf %223, %228 : vector<16x16xf32>
      %c34 = arith.constant 34 : index
      %230 = memref.load %arg3[%c34] : memref<98xf32, #tpu.memory_space<smem>>
      %c0_128 = arith.constant 0 : index
      %c4_129 = arith.constant 4 : index
      %c6_130 = arith.constant 6 : index
      %231 = vector.load %arg7[%c0_128, %c4_129, %c6_130] : memref<2x22x22xf32, #tpu.memory_space<vmem>>, vector<1x16x16xf32>
      %232 = vector.shape_cast %231 : vector<1x16x16xf32> to vector<16x16xf32>
      %233 = vector.broadcast %230 : f32 to vector<16x16xf32>
      %234 = arith.mulf %232, %233 : vector<16x16xf32>
      %235 = arith.addf %229, %234 : vector<16x16xf32>
      %c35 = arith.constant 35 : index
      %236 = memref.load %arg3[%c35] : memref<98xf32, #tpu.memory_space<smem>>
      %c0_131 = arith.constant 0 : index
      %c5_132 = arith.constant 5 : index
      %c0_133 = arith.constant 0 : index
      %237 = vector.load %arg7[%c0_131, %c5_132, %c0_133] : memref<2x22x22xf32, #tpu.memory_space<vmem>>, vector<1x16x16xf32>
      %238 = vector.shape_cast %237 : vector<1x16x16xf32> to vector<16x16xf32>
      %239 = vector.broadcast %236 : f32 to vector<16x16xf32>
      %240 = arith.mulf %238, %239 : vector<16x16xf32>
      %241 = arith.addf %235, %240 : vector<16x16xf32>
      %c36 = arith.constant 36 : index
      %242 = memref.load %arg3[%c36] : memref<98xf32, #tpu.memory_space<smem>>
      %c0_134 = arith.constant 0 : index
      %c5_135 = arith.constant 5 : index
      %c1_136 = arith.constant 1 : index
      %243 = vector.load %arg7[%c0_134, %c5_135, %c1_136] : memref<2x22x22xf32, #tpu.memory_space<vmem>>, vector<1x16x16xf32>
      %244 = vector.shape_cast %243 : vector<1x16x16xf32> to vector<16x16xf32>
      %245 = vector.broadcast %242 : f32 to vector<16x16xf32>
      %246 = arith.mulf %244, %245 : vector<16x16xf32>
      %247 = arith.addf %241, %246 : vector<16x16xf32>
      %c37 = arith.constant 37 : index
      %248 = memref.load %arg3[%c37] : memref<98xf32, #tpu.memory_space<smem>>
      %c0_137 = arith.constant 0 : index
      %c5_138 = arith.constant 5 : index
      %c2_139 = arith.constant 2 : index
      %249 = vector.load %arg7[%c0_137, %c5_138, %c2_139] : memref<2x22x22xf32, #tpu.memory_space<vmem>>, vector<1x16x16xf32>
      %250 = vector.shape_cast %249 : vector<1x16x16xf32> to vector<16x16xf32>
      %251 = vector.broadcast %248 : f32 to vector<16x16xf32>
      %252 = arith.mulf %250, %251 : vector<16x16xf32>
      %253 = arith.addf %247, %252 : vector<16x16xf32>
      %c38 = arith.constant 38 : index
      %254 = memref.load %arg3[%c38] : memref<98xf32, #tpu.memory_space<smem>>
      %c0_140 = arith.constant 0 : index
      %c5_141 = arith.constant 5 : index
      %c3_142 = arith.constant 3 : index
      %255 = vector.load %arg7[%c0_140, %c5_141, %c3_142] : memref<2x22x22xf32, #tpu.memory_space<vmem>>, vector<1x16x16xf32>
      %256 = vector.shape_cast %255 : vector<1x16x16xf32> to vector<16x16xf32>
      %257 = vector.broadcast %254 : f32 to vector<16x16xf32>
      %258 = arith.mulf %256, %257 : vector<16x16xf32>
      %259 = arith.addf %253, %258 : vector<16x16xf32>
      %c39 = arith.constant 39 : index
      %260 = memref.load %arg3[%c39] : memref<98xf32, #tpu.memory_space<smem>>
      %c0_143 = arith.constant 0 : index
      %c5_144 = arith.constant 5 : index
      %c4_145 = arith.constant 4 : index
      %261 = vector.load %arg7[%c0_143, %c5_144, %c4_145] : memref<2x22x22xf32, #tpu.memory_space<vmem>>, vector<1x16x16xf32>
      %262 = vector.shape_cast %261 : vector<1x16x16xf32> to vector<16x16xf32>
      %263 = vector.broadcast %260 : f32 to vector<16x16xf32>
      %264 = arith.mulf %262, %263 : vector<16x16xf32>
      %265 = arith.addf %259, %264 : vector<16x16xf32>
      %c40 = arith.constant 40 : index
      %266 = memref.load %arg3[%c40] : memref<98xf32, #tpu.memory_space<smem>>
      %c0_146 = arith.constant 0 : index
      %c5_147 = arith.constant 5 : index
      %c5_148 = arith.constant 5 : index
      %267 = vector.load %arg7[%c0_146, %c5_147, %c5_148] : memref<2x22x22xf32, #tpu.memory_space<vmem>>, vector<1x16x16xf32>
      %268 = vector.shape_cast %267 : vector<1x16x16xf32> to vector<16x16xf32>
      %269 = vector.broadcast %266 : f32 to vector<16x16xf32>
      %270 = arith.mulf %268, %269 : vector<16x16xf32>
      %271 = arith.addf %265, %270 : vector<16x16xf32>
      %c41 = arith.constant 41 : index
      %272 = memref.load %arg3[%c41] : memref<98xf32, #tpu.memory_space<smem>>
      %c0_149 = arith.constant 0 : index
      %c5_150 = arith.constant 5 : index
      %c6_151 = arith.constant 6 : index
      %273 = vector.load %arg7[%c0_149, %c5_150, %c6_151] : memref<2x22x22xf32, #tpu.memory_space<vmem>>, vector<1x16x16xf32>
      %274 = vector.shape_cast %273 : vector<1x16x16xf32> to vector<16x16xf32>
      %275 = vector.broadcast %272 : f32 to vector<16x16xf32>
      %276 = arith.mulf %274, %275 : vector<16x16xf32>
      %277 = arith.addf %271, %276 : vector<16x16xf32>
      %c42 = arith.constant 42 : index
      %278 = memref.load %arg3[%c42] : memref<98xf32, #tpu.memory_space<smem>>
      %c0_152 = arith.constant 0 : index
      %c6_153 = arith.constant 6 : index
      %c0_154 = arith.constant 0 : index
      %279 = vector.load %arg7[%c0_152, %c6_153, %c0_154] : memref<2x22x22xf32, #tpu.memory_space<vmem>>, vector<1x16x16xf32>
      %280 = vector.shape_cast %279 : vector<1x16x16xf32> to vector<16x16xf32>
      %281 = vector.broadcast %278 : f32 to vector<16x16xf32>
      %282 = arith.mulf %280, %281 : vector<16x16xf32>
      %283 = arith.addf %277, %282 : vector<16x16xf32>
      %c43 = arith.constant 43 : index
      %284 = memref.load %arg3[%c43] : memref<98xf32, #tpu.memory_space<smem>>
      %c0_155 = arith.constant 0 : index
      %c6_156 = arith.constant 6 : index
      %c1_157 = arith.constant 1 : index
      %285 = vector.load %arg7[%c0_155, %c6_156, %c1_157] : memref<2x22x22xf32, #tpu.memory_space<vmem>>, vector<1x16x16xf32>
      %286 = vector.shape_cast %285 : vector<1x16x16xf32> to vector<16x16xf32>
      %287 = vector.broadcast %284 : f32 to vector<16x16xf32>
      %288 = arith.mulf %286, %287 : vector<16x16xf32>
      %289 = arith.addf %283, %288 : vector<16x16xf32>
      %c44 = arith.constant 44 : index
      %290 = memref.load %arg3[%c44] : memref<98xf32, #tpu.memory_space<smem>>
      %c0_158 = arith.constant 0 : index
      %c6_159 = arith.constant 6 : index
      %c2_160 = arith.constant 2 : index
      %291 = vector.load %arg7[%c0_158, %c6_159, %c2_160] : memref<2x22x22xf32, #tpu.memory_space<vmem>>, vector<1x16x16xf32>
      %292 = vector.shape_cast %291 : vector<1x16x16xf32> to vector<16x16xf32>
      %293 = vector.broadcast %290 : f32 to vector<16x16xf32>
      %294 = arith.mulf %292, %293 : vector<16x16xf32>
      %295 = arith.addf %289, %294 : vector<16x16xf32>
      %c45 = arith.constant 45 : index
      %296 = memref.load %arg3[%c45] : memref<98xf32, #tpu.memory_space<smem>>
      %c0_161 = arith.constant 0 : index
      %c6_162 = arith.constant 6 : index
      %c3_163 = arith.constant 3 : index
      %297 = vector.load %arg7[%c0_161, %c6_162, %c3_163] : memref<2x22x22xf32, #tpu.memory_space<vmem>>, vector<1x16x16xf32>
      %298 = vector.shape_cast %297 : vector<1x16x16xf32> to vector<16x16xf32>
      %299 = vector.broadcast %296 : f32 to vector<16x16xf32>
      %300 = arith.mulf %298, %299 : vector<16x16xf32>
      %301 = arith.addf %295, %300 : vector<16x16xf32>
      %c46 = arith.constant 46 : index
      %302 = memref.load %arg3[%c46] : memref<98xf32, #tpu.memory_space<smem>>
      %c0_164 = arith.constant 0 : index
      %c6_165 = arith.constant 6 : index
      %c4_166 = arith.constant 4 : index
      %303 = vector.load %arg7[%c0_164, %c6_165, %c4_166] : memref<2x22x22xf32, #tpu.memory_space<vmem>>, vector<1x16x16xf32>
      %304 = vector.shape_cast %303 : vector<1x16x16xf32> to vector<16x16xf32>
      %305 = vector.broadcast %302 : f32 to vector<16x16xf32>
      %306 = arith.mulf %304, %305 : vector<16x16xf32>
      %307 = arith.addf %301, %306 : vector<16x16xf32>
      %c47 = arith.constant 47 : index
      %308 = memref.load %arg3[%c47] : memref<98xf32, #tpu.memory_space<smem>>
      %c0_167 = arith.constant 0 : index
      %c6_168 = arith.constant 6 : index
      %c5_169 = arith.constant 5 : index
      %309 = vector.load %arg7[%c0_167, %c6_168, %c5_169] : memref<2x22x22xf32, #tpu.memory_space<vmem>>, vector<1x16x16xf32>
      %310 = vector.shape_cast %309 : vector<1x16x16xf32> to vector<16x16xf32>
      %311 = vector.broadcast %308 : f32 to vector<16x16xf32>
      %312 = arith.mulf %310, %311 : vector<16x16xf32>
      %313 = arith.addf %307, %312 : vector<16x16xf32>
      %c48 = arith.constant 48 : index
      %314 = memref.load %arg3[%c48] : memref<98xf32, #tpu.memory_space<smem>>
      %c0_170 = arith.constant 0 : index
      %c6_171 = arith.constant 6 : index
      %c6_172 = arith.constant 6 : index
      %315 = vector.load %arg7[%c0_170, %c6_171, %c6_172] : memref<2x22x22xf32, #tpu.memory_space<vmem>>, vector<1x16x16xf32>
      %316 = vector.shape_cast %315 : vector<1x16x16xf32> to vector<16x16xf32>
      %317 = vector.broadcast %314 : f32 to vector<16x16xf32>
      %318 = arith.mulf %316, %317 : vector<16x16xf32>
      %319 = arith.addf %313, %318 : vector<16x16xf32>
      %c49 = arith.constant 49 : index
      %320 = memref.load %arg3[%c49] : memref<98xf32, #tpu.memory_space<smem>>
      %c1_173 = arith.constant 1 : index
      %c0_174 = arith.constant 0 : index
      %c0_175 = arith.constant 0 : index
      %321 = vector.load %arg7[%c1_173, %c0_174, %c0_175] : memref<2x22x22xf32, #tpu.memory_space<vmem>>, vector<1x16x16xf32>
      %322 = vector.shape_cast %321 : vector<1x16x16xf32> to vector<16x16xf32>
      %323 = vector.broadcast %320 : f32 to vector<16x16xf32>
      %324 = arith.mulf %322, %323 : vector<16x16xf32>
      %325 = arith.addf %319, %324 : vector<16x16xf32>
      %c50 = arith.constant 50 : index
      %326 = memref.load %arg3[%c50] : memref<98xf32, #tpu.memory_space<smem>>
      %c1_176 = arith.constant 1 : index
      %c0_177 = arith.constant 0 : index
      %c1_178 = arith.constant 1 : index
      %327 = vector.load %arg7[%c1_176, %c0_177, %c1_178] : memref<2x22x22xf32, #tpu.memory_space<vmem>>, vector<1x16x16xf32>
      %328 = vector.shape_cast %327 : vector<1x16x16xf32> to vector<16x16xf32>
      %329 = vector.broadcast %326 : f32 to vector<16x16xf32>
      %330 = arith.mulf %328, %329 : vector<16x16xf32>
      %331 = arith.addf %325, %330 : vector<16x16xf32>
      %c51 = arith.constant 51 : index
      %332 = memref.load %arg3[%c51] : memref<98xf32, #tpu.memory_space<smem>>
      %c1_179 = arith.constant 1 : index
      %c0_180 = arith.constant 0 : index
      %c2_181 = arith.constant 2 : index
      %333 = vector.load %arg7[%c1_179, %c0_180, %c2_181] : memref<2x22x22xf32, #tpu.memory_space<vmem>>, vector<1x16x16xf32>
      %334 = vector.shape_cast %333 : vector<1x16x16xf32> to vector<16x16xf32>
      %335 = vector.broadcast %332 : f32 to vector<16x16xf32>
      %336 = arith.mulf %334, %335 : vector<16x16xf32>
      %337 = arith.addf %331, %336 : vector<16x16xf32>
      %c52 = arith.constant 52 : index
      %338 = memref.load %arg3[%c52] : memref<98xf32, #tpu.memory_space<smem>>
      %c1_182 = arith.constant 1 : index
      %c0_183 = arith.constant 0 : index
      %c3_184 = arith.constant 3 : index
      %339 = vector.load %arg7[%c1_182, %c0_183, %c3_184] : memref<2x22x22xf32, #tpu.memory_space<vmem>>, vector<1x16x16xf32>
      %340 = vector.shape_cast %339 : vector<1x16x16xf32> to vector<16x16xf32>
      %341 = vector.broadcast %338 : f32 to vector<16x16xf32>
      %342 = arith.mulf %340, %341 : vector<16x16xf32>
      %343 = arith.addf %337, %342 : vector<16x16xf32>
      %c53 = arith.constant 53 : index
      %344 = memref.load %arg3[%c53] : memref<98xf32, #tpu.memory_space<smem>>
      %c1_185 = arith.constant 1 : index
      %c0_186 = arith.constant 0 : index
      %c4_187 = arith.constant 4 : index
      %345 = vector.load %arg7[%c1_185, %c0_186, %c4_187] : memref<2x22x22xf32, #tpu.memory_space<vmem>>, vector<1x16x16xf32>
      %346 = vector.shape_cast %345 : vector<1x16x16xf32> to vector<16x16xf32>
      %347 = vector.broadcast %344 : f32 to vector<16x16xf32>
      %348 = arith.mulf %346, %347 : vector<16x16xf32>
      %349 = arith.addf %343, %348 : vector<16x16xf32>
      %c54 = arith.constant 54 : index
      %350 = memref.load %arg3[%c54] : memref<98xf32, #tpu.memory_space<smem>>
      %c1_188 = arith.constant 1 : index
      %c0_189 = arith.constant 0 : index
      %c5_190 = arith.constant 5 : index
      %351 = vector.load %arg7[%c1_188, %c0_189, %c5_190] : memref<2x22x22xf32, #tpu.memory_space<vmem>>, vector<1x16x16xf32>
      %352 = vector.shape_cast %351 : vector<1x16x16xf32> to vector<16x16xf32>
      %353 = vector.broadcast %350 : f32 to vector<16x16xf32>
      %354 = arith.mulf %352, %353 : vector<16x16xf32>
      %355 = arith.addf %349, %354 : vector<16x16xf32>
      %c55 = arith.constant 55 : index
      %356 = memref.load %arg3[%c55] : memref<98xf32, #tpu.memory_space<smem>>
      %c1_191 = arith.constant 1 : index
      %c0_192 = arith.constant 0 : index
      %c6_193 = arith.constant 6 : index
      %357 = vector.load %arg7[%c1_191, %c0_192, %c6_193] : memref<2x22x22xf32, #tpu.memory_space<vmem>>, vector<1x16x16xf32>
      %358 = vector.shape_cast %357 : vector<1x16x16xf32> to vector<16x16xf32>
      %359 = vector.broadcast %356 : f32 to vector<16x16xf32>
      %360 = arith.mulf %358, %359 : vector<16x16xf32>
      %361 = arith.addf %355, %360 : vector<16x16xf32>
      %c56 = arith.constant 56 : index
      %362 = memref.load %arg3[%c56] : memref<98xf32, #tpu.memory_space<smem>>
      %c1_194 = arith.constant 1 : index
      %c1_195 = arith.constant 1 : index
      %c0_196 = arith.constant 0 : index
      %363 = vector.load %arg7[%c1_194, %c1_195, %c0_196] : memref<2x22x22xf32, #tpu.memory_space<vmem>>, vector<1x16x16xf32>
      %364 = vector.shape_cast %363 : vector<1x16x16xf32> to vector<16x16xf32>
      %365 = vector.broadcast %362 : f32 to vector<16x16xf32>
      %366 = arith.mulf %364, %365 : vector<16x16xf32>
      %367 = arith.addf %361, %366 : vector<16x16xf32>
      %c57 = arith.constant 57 : index
      %368 = memref.load %arg3[%c57] : memref<98xf32, #tpu.memory_space<smem>>
      %c1_197 = arith.constant 1 : index
      %c1_198 = arith.constant 1 : index
      %c1_199 = arith.constant 1 : index
      %369 = vector.load %arg7[%c1_197, %c1_198, %c1_199] : memref<2x22x22xf32, #tpu.memory_space<vmem>>, vector<1x16x16xf32>
      %370 = vector.shape_cast %369 : vector<1x16x16xf32> to vector<16x16xf32>
      %371 = vector.broadcast %368 : f32 to vector<16x16xf32>
      %372 = arith.mulf %370, %371 : vector<16x16xf32>
      %373 = arith.addf %367, %372 : vector<16x16xf32>
      %c58 = arith.constant 58 : index
      %374 = memref.load %arg3[%c58] : memref<98xf32, #tpu.memory_space<smem>>
      %c1_200 = arith.constant 1 : index
      %c1_201 = arith.constant 1 : index
      %c2_202 = arith.constant 2 : index
      %375 = vector.load %arg7[%c1_200, %c1_201, %c2_202] : memref<2x22x22xf32, #tpu.memory_space<vmem>>, vector<1x16x16xf32>
      %376 = vector.shape_cast %375 : vector<1x16x16xf32> to vector<16x16xf32>
      %377 = vector.broadcast %374 : f32 to vector<16x16xf32>
      %378 = arith.mulf %376, %377 : vector<16x16xf32>
      %379 = arith.addf %373, %378 : vector<16x16xf32>
      %c59 = arith.constant 59 : index
      %380 = memref.load %arg3[%c59] : memref<98xf32, #tpu.memory_space<smem>>
      %c1_203 = arith.constant 1 : index
      %c1_204 = arith.constant 1 : index
      %c3_205 = arith.constant 3 : index
      %381 = vector.load %arg7[%c1_203, %c1_204, %c3_205] : memref<2x22x22xf32, #tpu.memory_space<vmem>>, vector<1x16x16xf32>
      %382 = vector.shape_cast %381 : vector<1x16x16xf32> to vector<16x16xf32>
      %383 = vector.broadcast %380 : f32 to vector<16x16xf32>
      %384 = arith.mulf %382, %383 : vector<16x16xf32>
      %385 = arith.addf %379, %384 : vector<16x16xf32>
      %c60 = arith.constant 60 : index
      %386 = memref.load %arg3[%c60] : memref<98xf32, #tpu.memory_space<smem>>
      %c1_206 = arith.constant 1 : index
      %c1_207 = arith.constant 1 : index
      %c4_208 = arith.constant 4 : index
      %387 = vector.load %arg7[%c1_206, %c1_207, %c4_208] : memref<2x22x22xf32, #tpu.memory_space<vmem>>, vector<1x16x16xf32>
      %388 = vector.shape_cast %387 : vector<1x16x16xf32> to vector<16x16xf32>
      %389 = vector.broadcast %386 : f32 to vector<16x16xf32>
      %390 = arith.mulf %388, %389 : vector<16x16xf32>
      %391 = arith.addf %385, %390 : vector<16x16xf32>
      %c61 = arith.constant 61 : index
      %392 = memref.load %arg3[%c61] : memref<98xf32, #tpu.memory_space<smem>>
      %c1_209 = arith.constant 1 : index
      %c1_210 = arith.constant 1 : index
      %c5_211 = arith.constant 5 : index
      %393 = vector.load %arg7[%c1_209, %c1_210, %c5_211] : memref<2x22x22xf32, #tpu.memory_space<vmem>>, vector<1x16x16xf32>
      %394 = vector.shape_cast %393 : vector<1x16x16xf32> to vector<16x16xf32>
      %395 = vector.broadcast %392 : f32 to vector<16x16xf32>
      %396 = arith.mulf %394, %395 : vector<16x16xf32>
      %397 = arith.addf %391, %396 : vector<16x16xf32>
      %c62 = arith.constant 62 : index
      %398 = memref.load %arg3[%c62] : memref<98xf32, #tpu.memory_space<smem>>
      %c1_212 = arith.constant 1 : index
      %c1_213 = arith.constant 1 : index
      %c6_214 = arith.constant 6 : index
      %399 = vector.load %arg7[%c1_212, %c1_213, %c6_214] : memref<2x22x22xf32, #tpu.memory_space<vmem>>, vector<1x16x16xf32>
      %400 = vector.shape_cast %399 : vector<1x16x16xf32> to vector<16x16xf32>
      %401 = vector.broadcast %398 : f32 to vector<16x16xf32>
      %402 = arith.mulf %400, %401 : vector<16x16xf32>
      %403 = arith.addf %397, %402 : vector<16x16xf32>
      %c63 = arith.constant 63 : index
      %404 = memref.load %arg3[%c63] : memref<98xf32, #tpu.memory_space<smem>>
      %c1_215 = arith.constant 1 : index
      %c2_216 = arith.constant 2 : index
      %c0_217 = arith.constant 0 : index
      %405 = vector.load %arg7[%c1_215, %c2_216, %c0_217] : memref<2x22x22xf32, #tpu.memory_space<vmem>>, vector<1x16x16xf32>
      %406 = vector.shape_cast %405 : vector<1x16x16xf32> to vector<16x16xf32>
      %407 = vector.broadcast %404 : f32 to vector<16x16xf32>
      %408 = arith.mulf %406, %407 : vector<16x16xf32>
      %409 = arith.addf %403, %408 : vector<16x16xf32>
      %c64 = arith.constant 64 : index
      %410 = memref.load %arg3[%c64] : memref<98xf32, #tpu.memory_space<smem>>
      %c1_218 = arith.constant 1 : index
      %c2_219 = arith.constant 2 : index
      %c1_220 = arith.constant 1 : index
      %411 = vector.load %arg7[%c1_218, %c2_219, %c1_220] : memref<2x22x22xf32, #tpu.memory_space<vmem>>, vector<1x16x16xf32>
      %412 = vector.shape_cast %411 : vector<1x16x16xf32> to vector<16x16xf32>
      %413 = vector.broadcast %410 : f32 to vector<16x16xf32>
      %414 = arith.mulf %412, %413 : vector<16x16xf32>
      %415 = arith.addf %409, %414 : vector<16x16xf32>
      %c65 = arith.constant 65 : index
      %416 = memref.load %arg3[%c65] : memref<98xf32, #tpu.memory_space<smem>>
      %c1_221 = arith.constant 1 : index
      %c2_222 = arith.constant 2 : index
      %c2_223 = arith.constant 2 : index
      %417 = vector.load %arg7[%c1_221, %c2_222, %c2_223] : memref<2x22x22xf32, #tpu.memory_space<vmem>>, vector<1x16x16xf32>
      %418 = vector.shape_cast %417 : vector<1x16x16xf32> to vector<16x16xf32>
      %419 = vector.broadcast %416 : f32 to vector<16x16xf32>
      %420 = arith.mulf %418, %419 : vector<16x16xf32>
      %421 = arith.addf %415, %420 : vector<16x16xf32>
      %c66 = arith.constant 66 : index
      %422 = memref.load %arg3[%c66] : memref<98xf32, #tpu.memory_space<smem>>
      %c1_224 = arith.constant 1 : index
      %c2_225 = arith.constant 2 : index
      %c3_226 = arith.constant 3 : index
      %423 = vector.load %arg7[%c1_224, %c2_225, %c3_226] : memref<2x22x22xf32, #tpu.memory_space<vmem>>, vector<1x16x16xf32>
      %424 = vector.shape_cast %423 : vector<1x16x16xf32> to vector<16x16xf32>
      %425 = vector.broadcast %422 : f32 to vector<16x16xf32>
      %426 = arith.mulf %424, %425 : vector<16x16xf32>
      %427 = arith.addf %421, %426 : vector<16x16xf32>
      %c67 = arith.constant 67 : index
      %428 = memref.load %arg3[%c67] : memref<98xf32, #tpu.memory_space<smem>>
      %c1_227 = arith.constant 1 : index
      %c2_228 = arith.constant 2 : index
      %c4_229 = arith.constant 4 : index
      %429 = vector.load %arg7[%c1_227, %c2_228, %c4_229] : memref<2x22x22xf32, #tpu.memory_space<vmem>>, vector<1x16x16xf32>
      %430 = vector.shape_cast %429 : vector<1x16x16xf32> to vector<16x16xf32>
      %431 = vector.broadcast %428 : f32 to vector<16x16xf32>
      %432 = arith.mulf %430, %431 : vector<16x16xf32>
      %433 = arith.addf %427, %432 : vector<16x16xf32>
      %c68 = arith.constant 68 : index
      %434 = memref.load %arg3[%c68] : memref<98xf32, #tpu.memory_space<smem>>
      %c1_230 = arith.constant 1 : index
      %c2_231 = arith.constant 2 : index
      %c5_232 = arith.constant 5 : index
      %435 = vector.load %arg7[%c1_230, %c2_231, %c5_232] : memref<2x22x22xf32, #tpu.memory_space<vmem>>, vector<1x16x16xf32>
      %436 = vector.shape_cast %435 : vector<1x16x16xf32> to vector<16x16xf32>
      %437 = vector.broadcast %434 : f32 to vector<16x16xf32>
      %438 = arith.mulf %436, %437 : vector<16x16xf32>
      %439 = arith.addf %433, %438 : vector<16x16xf32>
      %c69 = arith.constant 69 : index
      %440 = memref.load %arg3[%c69] : memref<98xf32, #tpu.memory_space<smem>>
      %c1_233 = arith.constant 1 : index
      %c2_234 = arith.constant 2 : index
      %c6_235 = arith.constant 6 : index
      %441 = vector.load %arg7[%c1_233, %c2_234, %c6_235] : memref<2x22x22xf32, #tpu.memory_space<vmem>>, vector<1x16x16xf32>
      %442 = vector.shape_cast %441 : vector<1x16x16xf32> to vector<16x16xf32>
      %443 = vector.broadcast %440 : f32 to vector<16x16xf32>
      %444 = arith.mulf %442, %443 : vector<16x16xf32>
      %445 = arith.addf %439, %444 : vector<16x16xf32>
      %c70 = arith.constant 70 : index
      %446 = memref.load %arg3[%c70] : memref<98xf32, #tpu.memory_space<smem>>
      %c1_236 = arith.constant 1 : index
      %c3_237 = arith.constant 3 : index
      %c0_238 = arith.constant 0 : index
      %447 = vector.load %arg7[%c1_236, %c3_237, %c0_238] : memref<2x22x22xf32, #tpu.memory_space<vmem>>, vector<1x16x16xf32>
      %448 = vector.shape_cast %447 : vector<1x16x16xf32> to vector<16x16xf32>
      %449 = vector.broadcast %446 : f32 to vector<16x16xf32>
      %450 = arith.mulf %448, %449 : vector<16x16xf32>
      %451 = arith.addf %445, %450 : vector<16x16xf32>
      %c71 = arith.constant 71 : index
      %452 = memref.load %arg3[%c71] : memref<98xf32, #tpu.memory_space<smem>>
      %c1_239 = arith.constant 1 : index
      %c3_240 = arith.constant 3 : index
      %c1_241 = arith.constant 1 : index
      %453 = vector.load %arg7[%c1_239, %c3_240, %c1_241] : memref<2x22x22xf32, #tpu.memory_space<vmem>>, vector<1x16x16xf32>
      %454 = vector.shape_cast %453 : vector<1x16x16xf32> to vector<16x16xf32>
      %455 = vector.broadcast %452 : f32 to vector<16x16xf32>
      %456 = arith.mulf %454, %455 : vector<16x16xf32>
      %457 = arith.addf %451, %456 : vector<16x16xf32>
      %c72 = arith.constant 72 : index
      %458 = memref.load %arg3[%c72] : memref<98xf32, #tpu.memory_space<smem>>
      %c1_242 = arith.constant 1 : index
      %c3_243 = arith.constant 3 : index
      %c2_244 = arith.constant 2 : index
      %459 = vector.load %arg7[%c1_242, %c3_243, %c2_244] : memref<2x22x22xf32, #tpu.memory_space<vmem>>, vector<1x16x16xf32>
      %460 = vector.shape_cast %459 : vector<1x16x16xf32> to vector<16x16xf32>
      %461 = vector.broadcast %458 : f32 to vector<16x16xf32>
      %462 = arith.mulf %460, %461 : vector<16x16xf32>
      %463 = arith.addf %457, %462 : vector<16x16xf32>
      %c73 = arith.constant 73 : index
      %464 = memref.load %arg3[%c73] : memref<98xf32, #tpu.memory_space<smem>>
      %c1_245 = arith.constant 1 : index
      %c3_246 = arith.constant 3 : index
      %c3_247 = arith.constant 3 : index
      %465 = vector.load %arg7[%c1_245, %c3_246, %c3_247] : memref<2x22x22xf32, #tpu.memory_space<vmem>>, vector<1x16x16xf32>
      %466 = vector.shape_cast %465 : vector<1x16x16xf32> to vector<16x16xf32>
      %467 = vector.broadcast %464 : f32 to vector<16x16xf32>
      %468 = arith.mulf %466, %467 : vector<16x16xf32>
      %469 = arith.addf %463, %468 : vector<16x16xf32>
      %c74 = arith.constant 74 : index
      %470 = memref.load %arg3[%c74] : memref<98xf32, #tpu.memory_space<smem>>
      %c1_248 = arith.constant 1 : index
      %c3_249 = arith.constant 3 : index
      %c4_250 = arith.constant 4 : index
      %471 = vector.load %arg7[%c1_248, %c3_249, %c4_250] : memref<2x22x22xf32, #tpu.memory_space<vmem>>, vector<1x16x16xf32>
      %472 = vector.shape_cast %471 : vector<1x16x16xf32> to vector<16x16xf32>
      %473 = vector.broadcast %470 : f32 to vector<16x16xf32>
      %474 = arith.mulf %472, %473 : vector<16x16xf32>
      %475 = arith.addf %469, %474 : vector<16x16xf32>
      %c75 = arith.constant 75 : index
      %476 = memref.load %arg3[%c75] : memref<98xf32, #tpu.memory_space<smem>>
      %c1_251 = arith.constant 1 : index
      %c3_252 = arith.constant 3 : index
      %c5_253 = arith.constant 5 : index
      %477 = vector.load %arg7[%c1_251, %c3_252, %c5_253] : memref<2x22x22xf32, #tpu.memory_space<vmem>>, vector<1x16x16xf32>
      %478 = vector.shape_cast %477 : vector<1x16x16xf32> to vector<16x16xf32>
      %479 = vector.broadcast %476 : f32 to vector<16x16xf32>
      %480 = arith.mulf %478, %479 : vector<16x16xf32>
      %481 = arith.addf %475, %480 : vector<16x16xf32>
      %c76 = arith.constant 76 : index
      %482 = memref.load %arg3[%c76] : memref<98xf32, #tpu.memory_space<smem>>
      %c1_254 = arith.constant 1 : index
      %c3_255 = arith.constant 3 : index
      %c6_256 = arith.constant 6 : index
      %483 = vector.load %arg7[%c1_254, %c3_255, %c6_256] : memref<2x22x22xf32, #tpu.memory_space<vmem>>, vector<1x16x16xf32>
      %484 = vector.shape_cast %483 : vector<1x16x16xf32> to vector<16x16xf32>
      %485 = vector.broadcast %482 : f32 to vector<16x16xf32>
      %486 = arith.mulf %484, %485 : vector<16x16xf32>
      %487 = arith.addf %481, %486 : vector<16x16xf32>
      %c77 = arith.constant 77 : index
      %488 = memref.load %arg3[%c77] : memref<98xf32, #tpu.memory_space<smem>>
      %c1_257 = arith.constant 1 : index
      %c4_258 = arith.constant 4 : index
      %c0_259 = arith.constant 0 : index
      %489 = vector.load %arg7[%c1_257, %c4_258, %c0_259] : memref<2x22x22xf32, #tpu.memory_space<vmem>>, vector<1x16x16xf32>
      %490 = vector.shape_cast %489 : vector<1x16x16xf32> to vector<16x16xf32>
      %491 = vector.broadcast %488 : f32 to vector<16x16xf32>
      %492 = arith.mulf %490, %491 : vector<16x16xf32>
      %493 = arith.addf %487, %492 : vector<16x16xf32>
      %c78 = arith.constant 78 : index
      %494 = memref.load %arg3[%c78] : memref<98xf32, #tpu.memory_space<smem>>
      %c1_260 = arith.constant 1 : index
      %c4_261 = arith.constant 4 : index
      %c1_262 = arith.constant 1 : index
      %495 = vector.load %arg7[%c1_260, %c4_261, %c1_262] : memref<2x22x22xf32, #tpu.memory_space<vmem>>, vector<1x16x16xf32>
      %496 = vector.shape_cast %495 : vector<1x16x16xf32> to vector<16x16xf32>
      %497 = vector.broadcast %494 : f32 to vector<16x16xf32>
      %498 = arith.mulf %496, %497 : vector<16x16xf32>
      %499 = arith.addf %493, %498 : vector<16x16xf32>
      %c79 = arith.constant 79 : index
      %500 = memref.load %arg3[%c79] : memref<98xf32, #tpu.memory_space<smem>>
      %c1_263 = arith.constant 1 : index
      %c4_264 = arith.constant 4 : index
      %c2_265 = arith.constant 2 : index
      %501 = vector.load %arg7[%c1_263, %c4_264, %c2_265] : memref<2x22x22xf32, #tpu.memory_space<vmem>>, vector<1x16x16xf32>
      %502 = vector.shape_cast %501 : vector<1x16x16xf32> to vector<16x16xf32>
      %503 = vector.broadcast %500 : f32 to vector<16x16xf32>
      %504 = arith.mulf %502, %503 : vector<16x16xf32>
      %505 = arith.addf %499, %504 : vector<16x16xf32>
      %c80 = arith.constant 80 : index
      %506 = memref.load %arg3[%c80] : memref<98xf32, #tpu.memory_space<smem>>
      %c1_266 = arith.constant 1 : index
      %c4_267 = arith.constant 4 : index
      %c3_268 = arith.constant 3 : index
      %507 = vector.load %arg7[%c1_266, %c4_267, %c3_268] : memref<2x22x22xf32, #tpu.memory_space<vmem>>, vector<1x16x16xf32>
      %508 = vector.shape_cast %507 : vector<1x16x16xf32> to vector<16x16xf32>
      %509 = vector.broadcast %506 : f32 to vector<16x16xf32>
      %510 = arith.mulf %508, %509 : vector<16x16xf32>
      %511 = arith.addf %505, %510 : vector<16x16xf32>
      %c81 = arith.constant 81 : index
      %512 = memref.load %arg3[%c81] : memref<98xf32, #tpu.memory_space<smem>>
      %c1_269 = arith.constant 1 : index
      %c4_270 = arith.constant 4 : index
      %c4_271 = arith.constant 4 : index
      %513 = vector.load %arg7[%c1_269, %c4_270, %c4_271] : memref<2x22x22xf32, #tpu.memory_space<vmem>>, vector<1x16x16xf32>
      %514 = vector.shape_cast %513 : vector<1x16x16xf32> to vector<16x16xf32>
      %515 = vector.broadcast %512 : f32 to vector<16x16xf32>
      %516 = arith.mulf %514, %515 : vector<16x16xf32>
      %517 = arith.addf %511, %516 : vector<16x16xf32>
      %c82 = arith.constant 82 : index
      %518 = memref.load %arg3[%c82] : memref<98xf32, #tpu.memory_space<smem>>
      %c1_272 = arith.constant 1 : index
      %c4_273 = arith.constant 4 : index
      %c5_274 = arith.constant 5 : index
      %519 = vector.load %arg7[%c1_272, %c4_273, %c5_274] : memref<2x22x22xf32, #tpu.memory_space<vmem>>, vector<1x16x16xf32>
      %520 = vector.shape_cast %519 : vector<1x16x16xf32> to vector<16x16xf32>
      %521 = vector.broadcast %518 : f32 to vector<16x16xf32>
      %522 = arith.mulf %520, %521 : vector<16x16xf32>
      %523 = arith.addf %517, %522 : vector<16x16xf32>
      %c83 = arith.constant 83 : index
      %524 = memref.load %arg3[%c83] : memref<98xf32, #tpu.memory_space<smem>>
      %c1_275 = arith.constant 1 : index
      %c4_276 = arith.constant 4 : index
      %c6_277 = arith.constant 6 : index
      %525 = vector.load %arg7[%c1_275, %c4_276, %c6_277] : memref<2x22x22xf32, #tpu.memory_space<vmem>>, vector<1x16x16xf32>
      %526 = vector.shape_cast %525 : vector<1x16x16xf32> to vector<16x16xf32>
      %527 = vector.broadcast %524 : f32 to vector<16x16xf32>
      %528 = arith.mulf %526, %527 : vector<16x16xf32>
      %529 = arith.addf %523, %528 : vector<16x16xf32>
      %c84 = arith.constant 84 : index
      %530 = memref.load %arg3[%c84] : memref<98xf32, #tpu.memory_space<smem>>
      %c1_278 = arith.constant 1 : index
      %c5_279 = arith.constant 5 : index
      %c0_280 = arith.constant 0 : index
      %531 = vector.load %arg7[%c1_278, %c5_279, %c0_280] : memref<2x22x22xf32, #tpu.memory_space<vmem>>, vector<1x16x16xf32>
      %532 = vector.shape_cast %531 : vector<1x16x16xf32> to vector<16x16xf32>
      %533 = vector.broadcast %530 : f32 to vector<16x16xf32>
      %534 = arith.mulf %532, %533 : vector<16x16xf32>
      %535 = arith.addf %529, %534 : vector<16x16xf32>
      %c85 = arith.constant 85 : index
      %536 = memref.load %arg3[%c85] : memref<98xf32, #tpu.memory_space<smem>>
      %c1_281 = arith.constant 1 : index
      %c5_282 = arith.constant 5 : index
      %c1_283 = arith.constant 1 : index
      %537 = vector.load %arg7[%c1_281, %c5_282, %c1_283] : memref<2x22x22xf32, #tpu.memory_space<vmem>>, vector<1x16x16xf32>
      %538 = vector.shape_cast %537 : vector<1x16x16xf32> to vector<16x16xf32>
      %539 = vector.broadcast %536 : f32 to vector<16x16xf32>
      %540 = arith.mulf %538, %539 : vector<16x16xf32>
      %541 = arith.addf %535, %540 : vector<16x16xf32>
      %c86 = arith.constant 86 : index
      %542 = memref.load %arg3[%c86] : memref<98xf32, #tpu.memory_space<smem>>
      %c1_284 = arith.constant 1 : index
      %c5_285 = arith.constant 5 : index
      %c2_286 = arith.constant 2 : index
      %543 = vector.load %arg7[%c1_284, %c5_285, %c2_286] : memref<2x22x22xf32, #tpu.memory_space<vmem>>, vector<1x16x16xf32>
      %544 = vector.shape_cast %543 : vector<1x16x16xf32> to vector<16x16xf32>
      %545 = vector.broadcast %542 : f32 to vector<16x16xf32>
      %546 = arith.mulf %544, %545 : vector<16x16xf32>
      %547 = arith.addf %541, %546 : vector<16x16xf32>
      %c87 = arith.constant 87 : index
      %548 = memref.load %arg3[%c87] : memref<98xf32, #tpu.memory_space<smem>>
      %c1_287 = arith.constant 1 : index
      %c5_288 = arith.constant 5 : index
      %c3_289 = arith.constant 3 : index
      %549 = vector.load %arg7[%c1_287, %c5_288, %c3_289] : memref<2x22x22xf32, #tpu.memory_space<vmem>>, vector<1x16x16xf32>
      %550 = vector.shape_cast %549 : vector<1x16x16xf32> to vector<16x16xf32>
      %551 = vector.broadcast %548 : f32 to vector<16x16xf32>
      %552 = arith.mulf %550, %551 : vector<16x16xf32>
      %553 = arith.addf %547, %552 : vector<16x16xf32>
      %c88 = arith.constant 88 : index
      %554 = memref.load %arg3[%c88] : memref<98xf32, #tpu.memory_space<smem>>
      %c1_290 = arith.constant 1 : index
      %c5_291 = arith.constant 5 : index
      %c4_292 = arith.constant 4 : index
      %555 = vector.load %arg7[%c1_290, %c5_291, %c4_292] : memref<2x22x22xf32, #tpu.memory_space<vmem>>, vector<1x16x16xf32>
      %556 = vector.shape_cast %555 : vector<1x16x16xf32> to vector<16x16xf32>
      %557 = vector.broadcast %554 : f32 to vector<16x16xf32>
      %558 = arith.mulf %556, %557 : vector<16x16xf32>
      %559 = arith.addf %553, %558 : vector<16x16xf32>
      %c89 = arith.constant 89 : index
      %560 = memref.load %arg3[%c89] : memref<98xf32, #tpu.memory_space<smem>>
      %c1_293 = arith.constant 1 : index
      %c5_294 = arith.constant 5 : index
      %c5_295 = arith.constant 5 : index
      %561 = vector.load %arg7[%c1_293, %c5_294, %c5_295] : memref<2x22x22xf32, #tpu.memory_space<vmem>>, vector<1x16x16xf32>
      %562 = vector.shape_cast %561 : vector<1x16x16xf32> to vector<16x16xf32>
      %563 = vector.broadcast %560 : f32 to vector<16x16xf32>
      %564 = arith.mulf %562, %563 : vector<16x16xf32>
      %565 = arith.addf %559, %564 : vector<16x16xf32>
      %c90 = arith.constant 90 : index
      %566 = memref.load %arg3[%c90] : memref<98xf32, #tpu.memory_space<smem>>
      %c1_296 = arith.constant 1 : index
      %c5_297 = arith.constant 5 : index
      %c6_298 = arith.constant 6 : index
      %567 = vector.load %arg7[%c1_296, %c5_297, %c6_298] : memref<2x22x22xf32, #tpu.memory_space<vmem>>, vector<1x16x16xf32>
      %568 = vector.shape_cast %567 : vector<1x16x16xf32> to vector<16x16xf32>
      %569 = vector.broadcast %566 : f32 to vector<16x16xf32>
      %570 = arith.mulf %568, %569 : vector<16x16xf32>
      %571 = arith.addf %565, %570 : vector<16x16xf32>
      %c91 = arith.constant 91 : index
      %572 = memref.load %arg3[%c91] : memref<98xf32, #tpu.memory_space<smem>>
      %c1_299 = arith.constant 1 : index
      %c6_300 = arith.constant 6 : index
      %c0_301 = arith.constant 0 : index
      %573 = vector.load %arg7[%c1_299, %c6_300, %c0_301] : memref<2x22x22xf32, #tpu.memory_space<vmem>>, vector<1x16x16xf32>
      %574 = vector.shape_cast %573 : vector<1x16x16xf32> to vector<16x16xf32>
      %575 = vector.broadcast %572 : f32 to vector<16x16xf32>
      %576 = arith.mulf %574, %575 : vector<16x16xf32>
      %577 = arith.addf %571, %576 : vector<16x16xf32>
      %c92 = arith.constant 92 : index
      %578 = memref.load %arg3[%c92] : memref<98xf32, #tpu.memory_space<smem>>
      %c1_302 = arith.constant 1 : index
      %c6_303 = arith.constant 6 : index
      %c1_304 = arith.constant 1 : index
      %579 = vector.load %arg7[%c1_302, %c6_303, %c1_304] : memref<2x22x22xf32, #tpu.memory_space<vmem>>, vector<1x16x16xf32>
      %580 = vector.shape_cast %579 : vector<1x16x16xf32> to vector<16x16xf32>
      %581 = vector.broadcast %578 : f32 to vector<16x16xf32>
      %582 = arith.mulf %580, %581 : vector<16x16xf32>
      %583 = arith.addf %577, %582 : vector<16x16xf32>
      %c93 = arith.constant 93 : index
      %584 = memref.load %arg3[%c93] : memref<98xf32, #tpu.memory_space<smem>>
      %c1_305 = arith.constant 1 : index
      %c6_306 = arith.constant 6 : index
      %c2_307 = arith.constant 2 : index
      %585 = vector.load %arg7[%c1_305, %c6_306, %c2_307] : memref<2x22x22xf32, #tpu.memory_space<vmem>>, vector<1x16x16xf32>
      %586 = vector.shape_cast %585 : vector<1x16x16xf32> to vector<16x16xf32>
      %587 = vector.broadcast %584 : f32 to vector<16x16xf32>
      %588 = arith.mulf %586, %587 : vector<16x16xf32>
      %589 = arith.addf %583, %588 : vector<16x16xf32>
      %c94 = arith.constant 94 : index
      %590 = memref.load %arg3[%c94] : memref<98xf32, #tpu.memory_space<smem>>
      %c1_308 = arith.constant 1 : index
      %c6_309 = arith.constant 6 : index
      %c3_310 = arith.constant 3 : index
      %591 = vector.load %arg7[%c1_308, %c6_309, %c3_310] : memref<2x22x22xf32, #tpu.memory_space<vmem>>, vector<1x16x16xf32>
      %592 = vector.shape_cast %591 : vector<1x16x16xf32> to vector<16x16xf32>
      %593 = vector.broadcast %590 : f32 to vector<16x16xf32>
      %594 = arith.mulf %592, %593 : vector<16x16xf32>
      %595 = arith.addf %589, %594 : vector<16x16xf32>
      %c95 = arith.constant 95 : index
      %596 = memref.load %arg3[%c95] : memref<98xf32, #tpu.memory_space<smem>>
      %c1_311 = arith.constant 1 : index
      %c6_312 = arith.constant 6 : index
      %c4_313 = arith.constant 4 : index
      %597 = vector.load %arg7[%c1_311, %c6_312, %c4_313] : memref<2x22x22xf32, #tpu.memory_space<vmem>>, vector<1x16x16xf32>
      %598 = vector.shape_cast %597 : vector<1x16x16xf32> to vector<16x16xf32>
      %599 = vector.broadcast %596 : f32 to vector<16x16xf32>
      %600 = arith.mulf %598, %599 : vector<16x16xf32>
      %601 = arith.addf %595, %600 : vector<16x16xf32>
      %c96 = arith.constant 96 : index
      %602 = memref.load %arg3[%c96] : memref<98xf32, #tpu.memory_space<smem>>
      %c1_314 = arith.constant 1 : index
      %c6_315 = arith.constant 6 : index
      %c5_316 = arith.constant 5 : index
      %603 = vector.load %arg7[%c1_314, %c6_315, %c5_316] : memref<2x22x22xf32, #tpu.memory_space<vmem>>, vector<1x16x16xf32>
      %604 = vector.shape_cast %603 : vector<1x16x16xf32> to vector<16x16xf32>
      %605 = vector.broadcast %602 : f32 to vector<16x16xf32>
      %606 = arith.mulf %604, %605 : vector<16x16xf32>
      %607 = arith.addf %601, %606 : vector<16x16xf32>
      %c97 = arith.constant 97 : index
      %608 = memref.load %arg3[%c97] : memref<98xf32, #tpu.memory_space<smem>>
      %c1_317 = arith.constant 1 : index
      %c6_318 = arith.constant 6 : index
      %c6_319 = arith.constant 6 : index
      %609 = vector.load %arg7[%c1_317, %c6_318, %c6_319] : memref<2x22x22xf32, #tpu.memory_space<vmem>>, vector<1x16x16xf32>
      %610 = vector.shape_cast %609 : vector<1x16x16xf32> to vector<16x16xf32>
      %611 = vector.broadcast %608 : f32 to vector<16x16xf32>
      %612 = arith.mulf %610, %611 : vector<16x16xf32>
      %613 = arith.addf %607, %612 : vector<16x16xf32>
      %614 = arith.negf %613 : vector<16x16xf32>
      %615 = math.exp %614 : vector<16x16xf32>
      %cst_320 = arith.constant 1.000000e+00 : f32
      %616 = vector.broadcast %cst_320 : f32 to vector<16x16xf32>
      %617 = arith.addf %616, %615 : vector<16x16xf32>
      %618 = arith.divf %616, %617 : vector<16x16xf32>
      %c0_321 = arith.constant 0 : index
      %c0_322 = arith.constant 0 : index
      %c0_323 = arith.constant 0 : index
      %c0_324 = arith.constant 0 : index
      %619 = vector.load %arg4[%c0_321, %c0_322, %c0_323, %c0_324] : memref<1x1x16x16xf32, #tpu.memory_space<vmem>>, vector<1x1x16x16xf32>
      %620 = vector.shape_cast %619 : vector<1x1x16x16xf32> to vector<16x16xf32>
      %621 = vector.shape_cast %618 : vector<16x16xf32> to vector<1x1x16x16xf32>
      tpu.vector_store %arg4[%c0_321, %c0_322, %c0_323, %c0_324], %621 {strides = array<i32>} : memref<1x1x16x16xf32, #tpu.memory_space<vmem>>, vector<1x1x16x16xf32>,
    } else {
    }
    return
  }
  func.func @transform_0(%arg0: i32, %arg1: i32) -> (i32, i32, i32, i32) {
    %c0_i32 = arith.constant 0 : i32
    %c0_i32_0 = arith.constant 0 : i32
    %c0_i32_1 = arith.constant 0 : i32
    return %arg0, %arg1, %c0_i32, %c0_i32_0 : i32, i32, i32, i32
  }
  func.func @transform_1(%arg0: i32, %arg1: i32) -> i32 {
    %c0_i32 = arith.constant 0 : i32
    %c0_i32_0 = arith.constant 0 : i32
    return %c0_i32 : i32
  }
  func.func @transform_2(%arg0: i32, %arg1: i32) -> (i32, i32, i32, i32) {
    %c0_i32 = arith.constant 0 : i32
    %c0_i32_0 = arith.constant 0 : i32
    %c0_i32_1 = arith.constant 0 : i32
    %c0_i32_2 = arith.constant 0 : i32
    return %arg0, %c0_i32, %c0_i32_0, %c0_i32_1 : i32, i32, i32, i32
  }
}

</mosaic_0001>

<llo_original>
// kernel: tpu_custom_call.1
$region0: #{tpu_custom_call.1}
  #allocation0 [shape = 'u32[]', space=smem, size = 0x4, offset = 0x4, fixed_abs, tag = 'smem constant byte address 0x4 - core index']
  #allocation1 [shape = 'u32[144,128]{1,0:T(1,128)}', space=vmem, size = 0x12000, scoped, tag = 'internal scratch']
  #allocation2 [shape = 'f32[16,16]{1,0:T(8,128)}', space=vmem, size = 0x2000, scoped, tag = 'scratch operand']
  #allocation3 [shape = 'f32[16,16]{1,0:T(8,128)}', space=vmem, size = 0x2000, scoped, tag = 'scratch operand']
  #allocation4 [shape = 'f32[2,22,22]{2,1,0:T(8,128)}', space=vmem, size = 0x6000, scoped, tag = 'scratch operand']
  %s0 = inlined_call_operand.hbm [shape: f32[2,4,16,16], index: 0, kind: input, shape index: {}]
  %s1 = inlined_call_operand.vmem [shape: f32[98], index: 1, kind: input, shape index: {}]
  %s2 = inlined_call_operand.hbm [shape: f32[2,1,16,16], index: 2, kind: output, shape index: {}]
  %s3 = sld [smem:[#allocation0]]
  $region61: #{tpu_custom_call.1} parent=0
    _
  %s5 = ssub.s32 1, %s3
  %s6 = scalar_select 0, %s5, %s3
  $region1: #{tpu_custom_call.1} parent=0
    #allocation5 [shape = 'u8[65536]{0}', space=vmem, size = 0x10000, scoped, tag = 'input window, operand 0']
    #allocation6 [shape = 's32[2]{0}', space=sflag, size = 0x8, scoped, tag = 'scoped memory for tpu_custom_call.1']
    #allocation7 [shape = 's32[2]{0}', space=sflag, size = 0x8, scoped, tag = 'scoped memory for tpu_custom_call.1']
    #allocation8 [shape = 's32[2]{0}', space=sflag, size = 0x8, scoped, tag = 'scoped memory for tpu_custom_call.1']
    #allocation9 [shape = 'u8[512]{0}', space=smem, size = 0x200, scoped, tag = 'input window, operand 1, single buffered']
    #allocation10 [shape = 'u8[16384]{0}', space=vmem, size = 0x4000, scoped, tag = 'output window, operand 0']
    %7 = vsyncpa [#allocation6], 0
    %s8 = scalar_lea.sflag [#allocation6], 1
    %9 = vsyncpa %s8, 0
    %10 = vsyncpa [#allocation8], 0
    %11 = vsyncpa [#allocation7], 0
    %s12 = scalar_lea.sflag [#allocation7], 1
    %13 = vsyncpa %s12, 0
    loop: start=0, step=1, limit=4
    $region2: #{tpu_custom_call.1} parent=1 // loop_pre_header
      _
    $region3: #{tpu_custom_call.1} parent=1 // loop_header
      %s15 = sphi 0, %s19
      %p16 = scmp.ge.s32.totalorder %s15, 4
      %s22 = sphi 0, %s34
      %s23 = sphi 0, %s30
      %s24 = sphi 0, %s22
      %s25 = sphi 0, %s23
      %s26 = sphi 0, %s24
      %s27 = sphi 0, %s25
      %s39 = sphi 0, %s41
      %s42 = sphi 0, %s39
      %s43 = sphi 0, %s42
      %s59 = sphi 0, %s43
      %s63 = sphi 0, %s63
      %s65 = sphi 0, %s63
      %s66 = sphi 0, %s65
      %s80 = sphi 0, %s66
      %s86 = sphi 0, %s88
      %s89 = sphi 0, %s86
      %s90 = sphi 0, %s89
      %s106 = sphi 0, %s90
    $region4: #{tpu_custom_call.1} parent=1 // loop_header_branch
      %18 = sbr.rel (%p16) target = $region8
    $region5: #{tpu_custom_call.1} parent=1 // loop_body
      %s20 = ssub.s32 %s15, 1
      %s21 = ssub.s32 %s15, 2
      %s28 = sadd.s32 1, %s23
      %p29 = scmp.ge.s32.totalorder %s28, 1
      %s30 = scalar_select %p29, 0, %s28
      %s31 = sadd.s32 1, %s22
      %s32 = scalar_select %p29, %s31, %s22
      %p33 = scmp.ge.s32.totalorder %s32, 2
      %s34 = scalar_select %p33, 0, %s32
      %s35 = ssub.s32 %s22, %s34
      %s36 = ssub.s32 %s23, %s30
      %s37 = sor.u32 %s35, %s36
      %p38 = scmp.eq.s32.totalorder %s37, 0
      %s40 = sadd.s32 %s39, 1
      %s41 = scalar_select %p38, %s39, %s40
      %p44 = pneg %p38
      %p45 = scmp.eq.s32.totalorder %s15, 1
      %p46 = por %p44, %p45
      %p47 = scmp.ne.s32.totalorder %s39, %s42
      %p48 = scmp.eq.s32.totalorder %s15, 0
      %p49 = por %p47, %p48
      %p50 = scmp.ne.s32.totalorder %s39, %s42
      %p51 = scmp.eq.s32.totalorder %s20, 1
      %p52 = por %p50, %p51
      %p53 = scmp.ne.s32.totalorder %s42, %s43
      %p54 = scmp.eq.s32.totalorder %s20, 0
      %p55 = por %p53, %p54
      %p56 = scmp.ne.s32.totalorder %s42, %s43
      %p57 = scmp.eq.s32.totalorder %s21, 1
      %p58 = por %p56, %p57
      %p60 = scmp.ne.s32.totalorder %s43, %s59
      %p61 = scmp.eq.s32.totalorder %s21, 0
      %p62 = por %p60, %p61
      %s64 = sadd.s32 %s63, 1
      %p67 = scmp.eq.s32.totalorder %s15, 1
      %p68 = scmp.ne.s32.totalorder %s63, %s65
      %p69 = scmp.eq.s32.totalorder %s15, 0
      %p70 = por %p68, %p69
      %p71 = scmp.ne.s32.totalorder %s63, %s65
      %p72 = scmp.eq.s32.totalorder %s20, 1
      %p73 = por %p71, %p72
      %p74 = scmp.ne.s32.totalorder %s65, %s66
      %p75 = scmp.eq.s32.totalorder %s20, 0
      %p76 = por %p74, %p75
      %p77 = scmp.ne.s32.totalorder %s65, %s66
      %p78 = scmp.eq.s32.totalorder %s21, 1
      %p79 = por %p77, %p78
      %p81 = scmp.ne.s32.totalorder %s66, %s80
      %p82 = scmp.eq.s32.totalorder %s21, 0
      %p83 = por %p81, %p82
      %s84 = ssub.s32 %s22, %s34
      %p85 = scmp.eq.s32.totalorder %s84, 0
      %s87 = sadd.s32 %s86, 1
      %s88 = scalar_select %p85, %s86, %s87
      %p91 = pneg %p85
      %p92 = scmp.eq.s32.totalorder %s15, 1
      %p93 = por %p91, %p92
      %p94 = scmp.ne.s32.totalorder %s86, %s89
      %p95 = scmp.eq.s32.totalorder %s15, 0
      %p96 = por %p94, %p95
      %p97 = scmp.ne.s32.totalorder %s86, %s89
      %p98 = scmp.eq.s32.totalorder %s20, 1
      %p99 = por %p97, %p98
      %p100 = scmp.ne.s32.totalorder %s89, %s90
      %p101 = scmp.eq.s32.totalorder %s20, 0
      %p102 = por %p100, %p101
      %p103 = scmp.ne.s32.totalorder %s89, %s90
      %p104 = scmp.eq.s32.totalorder %s21, 1
      %p105 = por %p103, %p104
      %p107 = scmp.ne.s32.totalorder %s90, %s106
      %p108 = scmp.eq.s32.totalorder %s21, 0
      %p109 = por %p107, %p108
      %p110 = scmp.le.s32.totalorder 1, %s15
      %p111 = scmp.lt.s32.totalorder %s15, 3
      %p112 = pnand %p110, %p111
      %p113 = pneg %p112
      // Predicated region
      $region9: #{tpu_custom_call.1} parent=5 // pred_check
        _
      $region10: #{tpu_custom_call.1} parent=5 // pred_check_branch
        %115 = sbr.rel (%p112) target = $region12
      $region11: #{tpu_custom_call.1} parent=5 // pred_region
        %s116 = ssub.s32 %s15, 1
        // Predicated region
        $region13: #{tpu_custom_call.1} parent=11 // pred_check
          %p117 = pneg %p76
        $region14: #{tpu_custom_call.1} parent=11 // pred_check_branch
          %119 = sbr.rel (%p117) target = $region16
        $region15: #{tpu_custom_call.1} parent=11 // pred_region
          %s121 = ssub.s32 16, 16
          %122 = vsyncadd [#allocation8], %s121
          %s124 = sshll.u32 %s1, 4
          %s125 = int_to_ptr.vmem [resolvable:$true] %s124
          %127 = dma.vmem_to_smem %s125, 16, [#allocation9], [#allocation8]
        $region16: #{tpu_custom_call.1} parent=11 // pred_fallthru
          _
      $region12: #{tpu_custom_call.1} parent=5 // pred_fallthru
        _
      %p128 = scmp.lt.s32.totalorder %s15, 2
      // Predicated region
      $region17: #{tpu_custom_call.1} parent=5 // pred_check
        %p129 = pneg %p128
      $region18: #{tpu_custom_call.1} parent=5 // pred_check_branch
        %131 = sbr.rel (%p129) target = $region20
      $region19: #{tpu_custom_call.1} parent=5 // pred_region
        // Predicated region
        $region21: #{tpu_custom_call.1} parent=19 // pred_check
          %p132 = pneg %p49
        $region22: #{tpu_custom_call.1} parent=19 // pred_check_branch
          %134 = sbr.rel (%p132) target = $region24
        $region23: #{tpu_custom_call.1} parent=19 // pred_region
          %s135 = sand.u32 %s39, 1
          %s136 = scalar_lea.sflag [#allocation6], %s135
          %s137 = sand.u32 %s39, 1
          %s138 = smul.addr %s137, 64
          %s139 = scalar_lea.vmem [#allocation5], %s138
          %s140 = smul.u32 4, %s23
          %s142 = ssub.s32 1024, 1024
          %143 = vsyncadd %s136, %s142
          %s144 = smul.addr %s140, 2
          %s145 = smul.addr %s22, 8
          %s146 = sadd.s32 %s144, %s145
          %s147 = smul.addr %s146, 128
          %s148 = scalar_lea.hbm %s0, %s147
          %s149 = sshll.u32 %s139, 4
          %s150 = int_to_ptr.vmem [resolvable:$true] %s149
          %155 = dma.hbm_to_vmem [thread:$0]  %s148, 1024, %s150, %s136, 128, 128, 8
        $region24: #{tpu_custom_call.1} parent=19 // pred_fallthru
          _
      $region20: #{tpu_custom_call.1} parent=5 // pred_fallthru
        _
      %p156 = scmp.le.s32.totalorder 1, %s15
      %p157 = scmp.lt.s32.totalorder %s15, 3
      %p158 = pnand %p156, %p157
      %p159 = pneg %p158
      // Predicated region
      $region25: #{tpu_custom_call.1} parent=5 // pred_check
        _
      $region26: #{tpu_custom_call.1} parent=5 // pred_check_branch
        %161 = sbr.rel (%p158) target = $region28
      $region27: #{tpu_custom_call.1} parent=5 // pred_region
        %s162 = ssub.s32 %s15, 1
        %s163 = sand.u32 %s42, 1
        %s164 = scalar_lea.sflag [#allocation6], %s163
        %s165 = sand.u32 %s42, 1
        %s166 = smul.addr %s165, 64
        %s167 = scalar_lea.vmem [#allocation5], %s166
        // Predicated region
        $region29: #{tpu_custom_call.1} parent=27 // pred_check
          %p168 = pneg %p55
        $region30: #{tpu_custom_call.1} parent=27 // pred_check_branch
          %170 = sbr.rel (%p168) target = $region32
        $region31: #{tpu_custom_call.1} parent=27 // pred_region
          %171 = dma.done %s164, 1024
        $region32: #{tpu_custom_call.1} parent=27 // pred_fallthru
          _
        // Predicated region
        $region33: #{tpu_custom_call.1} parent=27 // pred_check
          %p172 = pneg %p76
        $region34: #{tpu_custom_call.1} parent=27 // pred_check_branch
          %174 = sbr.rel (%p172) target = $region36
        $region35: #{tpu_custom_call.1} parent=27 // pred_region
          %175 = dma.done [#allocation8], 16
        $region36: #{tpu_custom_call.1} parent=27 // pred_fallthru
          _
        %176 = sfence
        %s177 = sand.u32 %s42, 1
        %s178 = scalar_lea.sflag [#allocation6], %s177
        %s179 = sand.u32 %s42, 1
        %s180 = smul.addr %s179, 64
        %s181 = scalar_lea.vmem [#allocation5], %s180
        %p182 = pneg %p55
        %p183 = pneg %p52
        %p184 = pneg %p76
        %p185 = pneg %p73
        %p186 = pneg %p102
        %p187 = pneg %p99
        %s188 = sand.u32 %s89, 1
        %s189 = scalar_lea.sflag [#allocation7], %s188
        %s190 = sand.u32 %s89, 1
        %s191 = smul.addr %s190, 16
        %s192 = scalar_lea.vmem [#allocation10], %s191
        %s193 = smul.u32 4, %s25
        %v194 = vld [vmem:[%s167] sm:$0xff]
        %v195 = vld [vmem:[%s167 + $0x8] sm:$0xff]
        %v196 = vld [vmem:[%s167 + $0x10] sm:$0xff]
        %v197 = vld [vmem:[%s167 + $0x18] sm:$0xff]
        %v198 = vld [vmem:[%s167 + $0x20] sm:$0xff]
        %v199 = vld [vmem:[%s167 + $0x28] sm:$0xff]
        %v200 = vld [vmem:[%s167 + $0x30] sm:$0xff]
        %v201 = vld [vmem:[%s167 + $0x38] sm:$0xff]
        %vm202 = vcmask 130048
        %v203 = vsel %vm202, %v194, 0.0
        %v204 = vsel %vm202, %v196, 0.0
        %v205 = vadd.f32 %v203, %v204
        %v206 = vsel %vm202, %v198, 0.0
        %v207 = vadd.f32 %v205, %v206
        %v208 = vsel %vm202, %v200, 0.0
        %v209 = vadd.f32 %v207, %v208
        %v210 = vsel %vm202, %v195, 0.0
        %v211 = vsel %vm202, %v197, 0.0
        %v212 = vadd.f32 %v210, %v211
        %v213 = vsel %vm202, %v199, 0.0
        %v214 = vadd.f32 %v212, %v213
        %v215 = vsel %vm202, %v201, 0.0
        %v216 = vadd.f32 %v214, %v215
        %v217 = vsel %vm202, %v194, -inf
        %v218 = vsel %vm202, %v196, -inf
        %v219 = vsel %vm202, %v198, -inf
        %v220 = vmax.f32 %v217, %v219
        %v221 = vsel %vm202, %v200, -inf
        %v222 = vmax.f32 %v218, %v221
        %v223 = vmax.f32 %v220, %v222
        %v224 = vsel %vm202, %v195, -inf
        %v225 = vsel %vm202, %v197, -inf
        %v226 = vsel %vm202, %v199, -inf
        %v227 = vmax.f32 %v224, %v226
        %v228 = vsel %vm202, %v201, -inf
        %v229 = vmax.f32 %v225, %v228
        %v230 = vmax.f32 %v227, %v229
        %p231 = scmp.eq.s32.totalorder %s25, 0
        // Predicated region
        $region37: #{tpu_custom_call.1} parent=27 // pred_check
          %p232 = pneg %p231
        $region38: #{tpu_custom_call.1} parent=27 // pred_check_branch
          %234 = sbr.rel (%p232) target = $region40
        $region39: #{tpu_custom_call.1} parent=27 // pred_region
          %235 = vst.msk [vmem:[#allocation2] sm:$0xff] %vm202, %v209
          %236 = vst.msk [vmem:[#allocation2 + $0x8] sm:$0xff] %vm202, %v216
          %237 = vst.msk [vmem:[#allocation3] sm:$0xff] %vm202, %v223
          %238 = vst.msk [vmem:[#allocation3 + $0x8] sm:$0xff] %vm202, %v230
        $region40: #{tpu_custom_call.1} parent=27 // pred_fallthru
          _
        %p239 = scmp.gt.s32.totalorder %s25, 0
        // Predicated region
        $region41: #{tpu_custom_call.1} parent=27 // pred_check
          %p240 = pneg %p239
        $region42: #{tpu_custom_call.1} parent=27 // pred_check_branch
          %242 = sbr.rel (%p240) target = $region44
        $region43: #{tpu_custom_call.1} parent=27 // pred_region
          %v243 = vld [vmem:[#allocation2] sm:$0xff]
          %v244 = vld [vmem:[#allocation2 + $0x8] sm:$0xff]
          %v245 = vadd.f32 %v243, %v209
          %v246 = vadd.f32 %v244, %v216
          %247 = vst.msk [vmem:[#allocation2] sm:$0xff] %vm202, %v245
          %248 = vst.msk [vmem:[#allocation2 + $0x8] sm:$0xff] %vm202, %v246
          %v249 = vld [vmem:[#allocation3] sm:$0xff]
          %v250 = vld [vmem:[#allocation3 + $0x8] sm:$0xff]
          %v251 = vmax.f32 %v249, %v223
          %v252 = vmax.f32 %v250, %v230
          %253 = vst.msk [vmem:[#allocation3] sm:$0xff] %vm202, %v251
          %254 = vst.msk [vmem:[#allocation3 + $0x8] sm:$0xff] %vm202, %v252
        $region44: #{tpu_custom_call.1} parent=27 // pred_fallthru
          _
        // Predicated region
        $region45: #{tpu_custom_call.1} parent=27 // pred_check
          %p255 = pneg %p231
        $region46: #{tpu_custom_call.1} parent=27 // pred_check_branch
          %257 = sbr.rel (%p255) target = $region48
        $region47: #{tpu_custom_call.1} parent=27 // pred_region
          %vm258 = vcmask 179200
          %259 = vst.msk [vmem:[#allocation4] sm:$0xff] %vm258, 0.0
          %260 = vst.msk [vmem:[#allocation4 + $0x8] sm:$0xff] %vm258, 0.0
          %vm261 = vcmask 177152
          %262 = vst.msk [vmem:[#allocation4 + $0x10] sm:$0x3f] %vm261, 0.0
          %263 = vst.msk [vmem:[#allocation4 + $0x18] sm:$0xff] %vm258, 0.0
          %264 = vst.msk [vmem:[#allocation4 + $0x20] sm:$0xff] %vm258, 0.0
          %265 = vst.msk [vmem:[#allocation4 + $0x28] sm:$0x3f] %vm261, 0.0
          %v266 = vld [vmem:[#allocation2] sm:$0xff]
          %v267 = vld [vmem:[#allocation2 + $0x8] sm:$0xff]
          %v268 = vmul.f32 %v266, 0.25
          %v269 = vmul.f32 %v267, 0.25
          %272 = vrot.lane.b32.xlu0 %v268, 3
          %v273 = vpop.permute.xlu0 %272
          %274 = vrot.lane.b32.xlu0 %v269, 3
          %v275 = vpop.permute.xlu0 %274
          %vm278 = vcmask 154648
          %279 = vst.msk [vmem:[#allocation4 + $0x3] sm:$0xff] %vm278, %v273
          %280 = vst.msk [vmem:[#allocation4 + $0xb] sm:$0xff] %vm278, %v275
          %v281 = vld [vmem:[#allocation3] sm:$0xff]
          %v282 = vld [vmem:[#allocation3 + $0x8] sm:$0xff]
          %285 = vrot.lane.b32.xlu0 %v281, 3
          %v286 = vpop.permute.xlu0 %285
          %287 = vrot.lane.b32.xlu0 %v282, 3
          %v288 = vpop.permute.xlu0 %287
          %s291 = scalar_lea.vmem [#allocation4], 24
          %292 = vst.msk [vmem:[%s291 + $0x3] sm:$0xff] %vm278, %v286
          %293 = vst.msk [vmem:[%s291 + $0xb] sm:$0xff] %vm278, %v288
          %s294 = sld [smem:[#allocation9]]
          %v295 = vld [vmem:[#allocation4] sm:$0xff]
          %v296 = vld [vmem:[#allocation4 + $0x8] sm:$0xff]
          %v297 = vstv %s294
          %v298 = vmul.f32 %v295, %v297
          %v299 = vmul.f32 %v296, %v297
          %v300 = vadd.f32 %v298, 0.0
          %v301 = vadd.f32 %v299, 0.0
          %s302 = sld [smem:[#allocation9 + $0x1]]
          %v303 = vstv %s302
          %v304 = vmul.f32 %v295, %v303
          %v305 = vmul.f32 %v296, %v303
          %308 = vrot.lane.b32.xlu0 %v304, 127
          %v309 = vpop.permute.xlu0 %308
          %310 = vrot.lane.b32.xlu0 %v305, 127
          %v311 = vpop.permute.xlu0 %310
          %v314 = vadd.f32 %v300, %v309
          %v315 = vadd.f32 %v301, %v311
          %s316 = sld [smem:[#allocation9 + $0x2]]
          %v317 = vstv %s316
          %v318 = vmul.f32 %v295, %v317
          %v319 = vmul.f32 %v296, %v317
          %322 = vrot.lane.b32.xlu0 %v318, 126
          %v323 = vpop.permute.xlu0 %322
          %324 = vrot.lane.b32.xlu0 %v319, 126
          %v325 = vpop.permute.xlu0 %324
          %v328 = vadd.f32 %v314, %v323
          %v329 = vadd.f32 %v315, %v325
          %s330 = sld [smem:[#allocation9 + $0x3]]
          %v331 = vstv %s330
          %v332 = vmul.f32 %v295, %v331
          %v333 = vmul.f32 %v296, %v331
          %336 = vrot.lane.b32.xlu0 %v332, 125
          %v337 = vpop.permute.xlu0 %336
          %338 = vrot.lane.b32.xlu0 %v333, 125
          %v339 = vpop.permute.xlu0 %338
          %v342 = vadd.f32 %v328, %v337
          %v343 = vadd.f32 %v329, %v339
          %s344 = sld [smem:[#allocation9 + $0x4]]
          %v345 = vstv %s344
          %v346 = vmul.f32 %v295, %v345
          %v347 = vmul.f32 %v296, %v345
          %350 = vrot.lane.b32.xlu0 %v346, 124
          %v351 = vpop.permute.xlu0 %350
          %352 = vrot.lane.b32.xlu0 %v347, 124
          %v353 = vpop.permute.xlu0 %352
          %v356 = vadd.f32 %v342, %v351
          %v357 = vadd.f32 %v343, %v353
          %s358 = sld [smem:[#allocation9 + $0x5]]
          %v359 = vstv %s358
          %v360 = vmul.f32 %v295, %v359
          %v361 = vmul.f32 %v296, %v359
          %364 = vrot.lane.b32.xlu0 %v360, 123
          %v365 = vpop.permute.xlu0 %364
          %366 = vrot.lane.b32.xlu0 %v361, 123
          %v367 = vpop.permute.xlu0 %366
          %v370 = vadd.f32 %v356, %v365
          %v371 = vadd.f32 %v357, %v367
          %s372 = sld [smem:[#allocation9 + $0x6]]
          %v373 = vstv %s372
          %v374 = vmul.f32 %v295, %v373
          %v375 = vmul.f32 %v296, %v373
          %378 = vrot.lane.b32.xlu0 %v374, 122
          %v379 = vpop.permute.xlu0 %378
          %380 = vrot.lane.b32.xlu0 %v375, 122
          %v381 = vpop.permute.xlu0 %380
          %v384 = vadd.f32 %v370, %v379
          %v385 = vadd.f32 %v371, %v381
          %s386 = sld [smem:[#allocation9 + $0x7]]
          %v387 = vld [vmem:[#allocation4 + $0x1] sm:$0xff]
          %v388 = vld [vmem:[#allocation4 + $0x9] sm:$0xff]
          %v389 = vstv %s386
          %v390 = vmul.f32 %v387, %v389
          %v391 = vmul.f32 %v388, %v389
          %v392 = vadd.f32 %v384, %v390
          %v393 = vadd.f32 %v385, %v391
          %s394 = sld [smem:[#allocation9 + $0x8]]
          %v395 = vstv %s394
          %v396 = vmul.f32 %v387, %v395
          %v397 = vmul.f32 %v388, %v395
          %400 = vrot.lane.b32.xlu0 %v396, 127
          %v401 = vpop.permute.xlu0 %400
          %402 = vrot.lane.b32.xlu0 %v397, 127
          %v403 = vpop.permute.xlu0 %402
          %v406 = vadd.f32 %v392, %v401
          %v407 = vadd.f32 %v393, %v403
          %s408 = sld [smem:[#allocation9 + $0x9]]
          %v409 = vstv %s408
          %v410 = vmul.f32 %v387, %v409
          %v411 = vmul.f32 %v388, %v409
          %414 = vrot.lane.b32.xlu0 %v410, 126
          %v415 = vpop.permute.xlu0 %414
          %416 = vrot.lane.b32.xlu0 %v411, 126
          %v417 = vpop.permute.xlu0 %416
          %v420 = vadd.f32 %v406, %v415
          %v421 = vadd.f32 %v407, %v417
          %s422 = sld [smem:[#allocation9 + $0xa]]
          %v423 = vstv %s422
          %v424 = vmul.f32 %v387, %v423
          %v425 = vmul.f32 %v388, %v423
          %428 = vrot.lane.b32.xlu0 %v424, 125
          %v429 = vpop.permute.xlu0 %428
          %430 = vrot.lane.b32.xlu0 %v425, 125
          %v431 = vpop.permute.xlu0 %430
          %v434 = vadd.f32 %v420, %v429
          %v435 = vadd.f32 %v421, %v431
          %s436 = sld [smem:[#allocation9 + $0xb]]
          %v437 = vstv %s436
          %v438 = vmul.f32 %v387, %v437
          %v439 = vmul.f32 %v388, %v437
          %442 = vrot.lane.b32.xlu0 %v438, 124
          %v443 = vpop.permute.xlu0 %442
          %444 = vrot.lane.b32.xlu0 %v439, 124
          %v445 = vpop.permute.xlu0 %444
          %v448 = vadd.f32 %v434, %v443
          %v449 = vadd.f32 %v435, %v445
          %s450 = sld [smem:[#allocation9 + $0xc]]
          %v451 = vstv %s450
          %v452 = vmul.f32 %v387, %v451
          %v453 = vmul.f32 %v388, %v451
          %456 = vrot.lane.b32.xlu0 %v452, 123
          %v457 = vpop.permute.xlu0 %456
          %458 = vrot.lane.b32.xlu0 %v453, 123
          %v459 = vpop.permute.xlu0 %458
          %v462 = vadd.f32 %v448, %v457
          %v463 = vadd.f32 %v449, %v459
          %s464 = sld [smem:[#allocation9 + $0xd]]
          %v465 = vstv %s464
          %v466 = vmul.f32 %v387, %v465
          %v467 = vmul.f32 %v388, %v465
          %470 = vrot.lane.b32.xlu0 %v466, 122
          %v471 = vpop.permute.xlu0 %470
          %472 = vrot.lane.b32.xlu0 %v467, 122
          %v473 = vpop.permute.xlu0 %472
          %v476 = vadd.f32 %v462, %v471
          %v477 = vadd.f32 %v463, %v473
          %s478 = sld [smem:[#allocation9 + $0xe]]
          %v479 = vld [vmem:[#allocation4 + $0x2] sm:$0xff]
          %v480 = vld [vmem:[#allocation4 + $0xa] sm:$0xff]
          %v481 = vstv %s478
          %v482 = vmul.f32 %v479, %v481
          %v483 = vmul.f32 %v480, %v481
          %v484 = vadd.f32 %v476, %v482
          %v485 = vadd.f32 %v477, %v483
          %s486 = sld [smem:[#allocation9 + $0xf]]
          %v487 = vstv %s486
          %v488 = vmul.f32 %v479, %v487
          %v489 = vmul.f32 %v480, %v487
          %492 = vrot.lane.b32.xlu0 %v488, 127
          %v493 = vpop.permute.xlu0 %492
          %494 = vrot.lane.b32.xlu0 %v489, 127
          %v495 = vpop.permute.xlu0 %494
          %v498 = vadd.f32 %v484, %v493
          %v499 = vadd.f32 %v485, %v495
          %s500 = sld [smem:[#allocation9 + $0x10]]
          %v501 = vstv %s500
          %v502 = vmul.f32 %v479, %v501
          %v503 = vmul.f32 %v480, %v501
          %506 = vrot.lane.b32.xlu0 %v502, 126
          %v507 = vpop.permute.xlu0 %506
          %508 = vrot.lane.b32.xlu0 %v503, 126
          %v509 = vpop.permute.xlu0 %508
          %v512 = vadd.f32 %v498, %v507
          %v513 = vadd.f32 %v499, %v509
          %s514 = sld [smem:[#allocation9 + $0x11]]
          %v515 = vstv %s514
          %v516 = vmul.f32 %v479, %v515
          %v517 = vmul.f32 %v480, %v515
          %520 = vrot.lane.b32.xlu0 %v516, 125
          %v521 = vpop.permute.xlu0 %520
          %522 = vrot.lane.b32.xlu0 %v517, 125
          %v523 = vpop.permute.xlu0 %522
          %v526 = vadd.f32 %v512, %v521
          %v527 = vadd.f32 %v513, %v523
          %s528 = sld [smem:[#allocation9 + $0x12]]
          %v529 = vstv %s528
          %v530 = vmul.f32 %v479, %v529
          %v531 = vmul.f32 %v480, %v529
          %534 = vrot.lane.b32.xlu0 %v530, 124
          %v535 = vpop.permute.xlu0 %534
          %536 = vrot.lane.b32.xlu0 %v531, 124
          %v537 = vpop.permute.xlu0 %536
          %v540 = vadd.f32 %v526, %v535
          %v541 = vadd.f32 %v527, %v537
          %s542 = sld [smem:[#allocation9 + $0x13]]
          %v543 = vstv %s542
          %v544 = vmul.f32 %v479, %v543
          %v545 = vmul.f32 %v480, %v543
          %548 = vrot.lane.b32.xlu0 %v544, 123
          %v549 = vpop.permute.xlu0 %548
          %550 = vrot.lane.b32.xlu0 %v545, 123
          %v551 = vpop.permute.xlu0 %550
          %v554 = vadd.f32 %v540, %v549
          %v555 = vadd.f32 %v541, %v551
          %s556 = sld [smem:[#allocation9 + $0x14]]
          %v557 = vstv %s556
          %v558 = vmul.f32 %v479, %v557
          %v559 = vmul.f32 %v480, %v557
          %562 = vrot.lane.b32.xlu0 %v558, 122
          %v563 = vpop.permute.xlu0 %562
          %564 = vrot.lane.b32.xlu0 %v559, 122
          %v565 = vpop.permute.xlu0 %564
          %v568 = vadd.f32 %v554, %v563
          %v569 = vadd.f32 %v555, %v565
          %s570 = sld [smem:[#allocation9 + $0x15]]
          %v571 = vld [vmem:[#allocation4 + $0x3] sm:$0xff]
          %v572 = vld [vmem:[#allocation4 + $0xb] sm:$0xff]
          %v573 = vstv %s570
          %v574 = vmul.f32 %v571, %v573
          %v575 = vmul.f32 %v572, %v573
          %v576 = vadd.f32 %v568, %v574
          %v577 = vadd.f32 %v569, %v575
          %s578 = sld [smem:[#allocation9 + $0x16]]
          %v579 = vstv %s578
          %v580 = vmul.f32 %v571, %v579
          %v581 = vmul.f32 %v572, %v579
          %584 = vrot.lane.b32.xlu0 %v580, 127
          %v585 = vpop.permute.xlu0 %584
          %586 = vrot.lane.b32.xlu0 %v581, 127
          %v587 = vpop.permute.xlu0 %586
          %v590 = vadd.f32 %v576, %v585
          %v591 = vadd.f32 %v577, %v587
          %s592 = sld [smem:[#allocation9 + $0x17]]
          %v593 = vstv %s592
          %v594 = vmul.f32 %v571, %v593
          %v595 = vmul.f32 %v572, %v593
          %598 = vrot.lane.b32.xlu0 %v594, 126
          %v599 = vpop.permute.xlu0 %598
          %600 = vrot.lane.b32.xlu0 %v595, 126
          %v601 = vpop.permute.xlu0 %600
          %v604 = vadd.f32 %v590, %v599
          %v605 = vadd.f32 %v591, %v601
          %s606 = sld [smem:[#allocation9 + $0x18]]
          %v607 = vstv %s606
          %v608 = vmul.f32 %v571, %v607
          %v609 = vmul.f32 %v572, %v607
          %612 = vrot.lane.b32.xlu0 %v608, 125
          %v613 = vpop.permute.xlu0 %612
          %614 = vrot.lane.b32.xlu0 %v609, 125
          %v615 = vpop.permute.xlu0 %614
          %v618 = vadd.f32 %v604, %v613
          %v619 = vadd.f32 %v605, %v615
          %s620 = sld [smem:[#allocation9 + $0x19]]
          %v621 = vstv %s620
          %v622 = vmul.f32 %v571, %v621
          %v623 = vmul.f32 %v572, %v621
          %626 = vrot.lane.b32.xlu0 %v622, 124
          %v627 = vpop.permute.xlu0 %626
          %628 = vrot.lane.b32.xlu0 %v623, 124
          %v629 = vpop.permute.xlu0 %628
          %v632 = vadd.f32 %v618, %v627
          %v633 = vadd.f32 %v619, %v629
          %s634 = sld [smem:[#allocation9 + $0x1a]]
          %v635 = vstv %s634
          %v636 = vmul.f32 %v571, %v635
          %v637 = vmul.f32 %v572, %v635
          %640 = vrot.lane.b32.xlu0 %v636, 123
          %v641 = vpop.permute.xlu0 %640
          %642 = vrot.lane.b32.xlu0 %v637, 123
          %v643 = vpop.permute.xlu0 %642
          %v646 = vadd.f32 %v632, %v641
          %v647 = vadd.f32 %v633, %v643
          %s648 = sld [smem:[#allocation9 + $0x1b]]
          %v649 = vstv %s648
          %v650 = vmul.f32 %v571, %v649
          %v651 = vmul.f32 %v572, %v649
          %654 = vrot.lane.b32.xlu0 %v650, 122
          %v655 = vpop.permute.xlu0 %654
          %656 = vrot.lane.b32.xlu0 %v651, 122
          %v657 = vpop.permute.xlu0 %656
          %v660 = vadd.f32 %v646, %v655
          %v661 = vadd.f32 %v647, %v657
          %s662 = sld [smem:[#allocation9 + $0x1c]]
          %v663 = vld [vmem:[#allocation4 + $0x4] sm:$0xff]
          %v664 = vld [vmem:[#allocation4 + $0xc] sm:$0xff]
          %v665 = vstv %s662
          %v666 = vmul.f32 %v663, %v665
          %v667 = vmul.f32 %v664, %v665
          %v668 = vadd.f32 %v660, %v666
          %v669 = vadd.f32 %v661, %v667
          %s670 = sld [smem:[#allocation9 + $0x1d]]
          %v671 = vstv %s670
          %v672 = vmul.f32 %v663, %v671
          %v673 = vmul.f32 %v664, %v671
          %676 = vrot.lane.b32.xlu0 %v672, 127
          %v677 = vpop.permute.xlu0 %676
          %678 = vrot.lane.b32.xlu0 %v673, 127
          %v679 = vpop.permute.xlu0 %678
          %v682 = vadd.f32 %v668, %v677
          %v683 = vadd.f32 %v669, %v679
          %s684 = sld [smem:[#allocation9 + $0x1e]]
          %v685 = vstv %s684
          %v686 = vmul.f32 %v663, %v685
          %v687 = vmul.f32 %v664, %v685
          %690 = vrot.lane.b32.xlu0 %v686, 126
          %v691 = vpop.permute.xlu0 %690
          %692 = vrot.lane.b32.xlu0 %v687, 126
          %v693 = vpop.permute.xlu0 %692
          %v696 = vadd.f32 %v682, %v691
          %v697 = vadd.f32 %v683, %v693
          %s698 = sld [smem:[#allocation9 + $0x1f]]
          %v699 = vstv %s698
          %v700 = vmul.f32 %v663, %v699
          %v701 = vmul.f32 %v664, %v699
          %704 = vrot.lane.b32.xlu0 %v700, 125
          %v705 = vpop.permute.xlu0 %704
          %706 = vrot.lane.b32.xlu0 %v701, 125
          %v707 = vpop.permute.xlu0 %706
          %v710 = vadd.f32 %v696, %v705
          %v711 = vadd.f32 %v697, %v707
          %s712 = sld [smem:[#allocation9 + $0x20]]
          %v713 = vstv %s712
          %v714 = vmul.f32 %v663, %v713
          %v715 = vmul.f32 %v664, %v713
          %718 = vrot.lane.b32.xlu0 %v714, 124
          %v719 = vpop.permute.xlu0 %718
          %720 = vrot.lane.b32.xlu0 %v715, 124
          %v721 = vpop.permute.xlu0 %720
          %v724 = vadd.f32 %v710, %v719
          %v725 = vadd.f32 %v711, %v721
          %s726 = sld [smem:[#allocation9 + $0x21]]
          %v727 = vstv %s726
          %v728 = vmul.f32 %v663, %v727
          %v729 = vmul.f32 %v664, %v727
          %732 = vrot.lane.b32.xlu0 %v728, 123
          %v733 = vpop.permute.xlu0 %732
          %734 = vrot.lane.b32.xlu0 %v729, 123
          %v735 = vpop.permute.xlu0 %734
          %v738 = vadd.f32 %v724, %v733
          %v739 = vadd.f32 %v725, %v735
          %s740 = sld [smem:[#allocation9 + $0x22]]
          %v741 = vstv %s740
          %v742 = vmul.f32 %v663, %v741
          %v743 = vmul.f32 %v664, %v741
          %746 = vrot.lane.b32.xlu0 %v742, 122
          %v747 = vpop.permute.xlu0 %746
          %748 = vrot.lane.b32.xlu0 %v743, 122
          %v749 = vpop.permute.xlu0 %748
          %v752 = vadd.f32 %v738, %v747
          %v753 = vadd.f32 %v739, %v749
          %s754 = sld [smem:[#allocation9 + $0x23]]
          %v755 = vld [vmem:[#allocation4 + $0x5] sm:$0xff]
          %v756 = vld [vmem:[#allocation4 + $0xd] sm:$0xff]
          %v757 = vstv %s754
          %v758 = vmul.f32 %v755, %v757
          %v759 = vmul.f32 %v756, %v757
          %v760 = vadd.f32 %v752, %v758
          %v761 = vadd.f32 %v753, %v759
          %s762 = sld [smem:[#allocation9 + $0x24]]
          %v763 = vstv %s762
          %v764 = vmul.f32 %v755, %v763
          %v765 = vmul.f32 %v756, %v763
          %768 = vrot.lane.b32.xlu0 %v764, 127
          %v769 = vpop.permute.xlu0 %768
          %770 = vrot.lane.b32.xlu0 %v765, 127
          %v771 = vpop.permute.xlu0 %770
          %v774 = vadd.f32 %v760, %v769
          %v775 = vadd.f32 %v761, %v771
          %s776 = sld [smem:[#allocation9 + $0x25]]
          %v777 = vstv %s776
          %v778 = vmul.f32 %v755, %v777
          %v779 = vmul.f32 %v756, %v777
          %782 = vrot.lane.b32.xlu0 %v778, 126
          %v783 = vpop.permute.xlu0 %782
          %784 = vrot.lane.b32.xlu0 %v779, 126
          %v785 = vpop.permute.xlu0 %784
          %v788 = vadd.f32 %v774, %v783
          %v789 = vadd.f32 %v775, %v785
          %s790 = sld [smem:[#allocation9 + $0x26]]
          %v791 = vstv %s790
          %v792 = vmul.f32 %v755, %v791
          %v793 = vmul.f32 %v756, %v791
          %796 = vrot.lane.b32.xlu0 %v792, 125
          %v797 = vpop.permute.xlu0 %796
          %798 = vrot.lane.b32.xlu0 %v793, 125
          %v799 = vpop.permute.xlu0 %798
          %v802 = vadd.f32 %v788, %v797
          %v803 = vadd.f32 %v789, %v799
          %s804 = sld [smem:[#allocation9 + $0x27]]
          %v805 = vstv %s804
          %v806 = vmul.f32 %v755, %v805
          %v807 = vmul.f32 %v756, %v805
          %810 = vrot.lane.b32.xlu0 %v806, 124
          %v811 = vpop.permute.xlu0 %810
          %812 = vrot.lane.b32.xlu0 %v807, 124
          %v813 = vpop.permute.xlu0 %812
          %v816 = vadd.f32 %v802, %v811
          %v817 = vadd.f32 %v803, %v813
          %s818 = sld [smem:[#allocation9 + $0x28]]
          %v819 = vstv %s818
          %v820 = vmul.f32 %v755, %v819
          %v821 = vmul.f32 %v756, %v819
          %824 = vrot.lane.b32.xlu0 %v820, 123
          %v825 = vpop.permute.xlu0 %824
          %826 = vrot.lane.b32.xlu0 %v821, 123
          %v827 = vpop.permute.xlu0 %826
          %v830 = vadd.f32 %v816, %v825
          %v831 = vadd.f32 %v817, %v827
          %s832 = sld [smem:[#allocation9 + $0x29]]
          %v833 = vstv %s832
          %v834 = vmul.f32 %v755, %v833
          %v835 = vmul.f32 %v756, %v833
          %838 = vrot.lane.b32.xlu0 %v834, 122
          %v839 = vpop.permute.xlu0 %838
          %840 = vrot.lane.b32.xlu0 %v835, 122
          %v841 = vpop.permute.xlu0 %840
          %v844 = vadd.f32 %v830, %v839
          %v845 = vadd.f32 %v831, %v841
          %s846 = sld [smem:[#allocation9 + $0x2a]]
          %v847 = vld [vmem:[#allocation4 + $0x6] sm:$0xff]
          %v848 = vld [vmem:[#allocation4 + $0xe] sm:$0xff]
          %v849 = vstv %s846
          %v850 = vmul.f32 %v847, %v849
          %v851 = vmul.f32 %v848, %v849
          %v852 = vadd.f32 %v844, %v850
          %v853 = vadd.f32 %v845, %v851
          %s854 = sld [smem:[#allocation9 + $0x2b]]
          %v855 = vstv %s854
          %v856 = vmul.f32 %v847, %v855
          %v857 = vmul.f32 %v848, %v855
          %860 = vrot.lane.b32.xlu0 %v856, 127
          %v861 = vpop.permute.xlu0 %860
          %862 = vrot.lane.b32.xlu0 %v857, 127
          %v863 = vpop.permute.xlu0 %862
          %v866 = vadd.f32 %v852, %v861
          %v867 = vadd.f32 %v853, %v863
          %s868 = sld [smem:[#allocation9 + $0x2c]]
          %v869 = vstv %s868
          %v870 = vmul.f32 %v847, %v869
          %v871 = vmul.f32 %v848, %v869
          %874 = vrot.lane.b32.xlu0 %v870, 126
          %v875 = vpop.permute.xlu0 %874
          %876 = vrot.lane.b32.xlu0 %v871, 126
          %v877 = vpop.permute.xlu0 %876
          %v880 = vadd.f32 %v866, %v875
          %v881 = vadd.f32 %v867, %v877
          %s882 = sld [smem:[#allocation9 + $0x2d]]
          %v883 = vstv %s882
          %v884 = vmul.f32 %v847, %v883
          %v885 = vmul.f32 %v848, %v883
          %888 = vrot.lane.b32.xlu0 %v884, 125
          %v889 = vpop.permute.xlu0 %888
          %890 = vrot.lane.b32.xlu0 %v885, 125
          %v891 = vpop.permute.xlu0 %890
          %v894 = vadd.f32 %v880, %v889
          %v895 = vadd.f32 %v881, %v891
          %s896 = sld [smem:[#allocation9 + $0x2e]]
          %v897 = vstv %s896
          %v898 = vmul.f32 %v847, %v897
          %v899 = vmul.f32 %v848, %v897
          %902 = vrot.lane.b32.xlu0 %v898, 124
          %v903 = vpop.permute.xlu0 %902
          %904 = vrot.lane.b32.xlu0 %v899, 124
          %v905 = vpop.permute.xlu0 %904
          %v908 = vadd.f32 %v894, %v903
          %v909 = vadd.f32 %v895, %v905
          %s910 = sld [smem:[#allocation9 + $0x2f]]
          %v911 = vstv %s910
          %v912 = vmul.f32 %v847, %v911
          %v913 = vmul.f32 %v848, %v911
          %916 = vrot.lane.b32.xlu0 %v912, 123
          %v917 = vpop.permute.xlu0 %916
          %918 = vrot.lane.b32.xlu0 %v913, 123
          %v919 = vpop.permute.xlu0 %918
          %v922 = vadd.f32 %v908, %v917
          %v923 = vadd.f32 %v909, %v919
          %s924 = sld [smem:[#allocation9 + $0x30]]
          %v925 = vstv %s924
          %v926 = vmul.f32 %v847, %v925
          %v927 = vmul.f32 %v848, %v925
          %930 = vrot.lane.b32.xlu0 %v926, 122
          %v931 = vpop.permute.xlu0 %930
          %932 = vrot.lane.b32.xlu0 %v927, 122
          %v933 = vpop.permute.xlu0 %932
          %v936 = vadd.f32 %v922, %v931
          %v937 = vadd.f32 %v923, %v933
          %s938 = sld [smem:[#allocation9 + $0x31]]
          %v939 = vld [vmem:[%s291] sm:$0xff]
          %v940 = vld [vmem:[%s291 + $0x8] sm:$0xff]
          %v941 = vstv %s938
          %v942 = vmul.f32 %v939, %v941
          %v943 = vmul.f32 %v940, %v941
          %v944 = vadd.f32 %v936, %v942
          %v945 = vadd.f32 %v937, %v943
          %s946 = sld [smem:[#allocation9 + $0x32]]
          %v947 = vstv %s946
          %v948 = vmul.f32 %v939, %v947
          %v949 = vmul.f32 %v940, %v947
          %952 = vrot.lane.b32.xlu0 %v948, 127
          %v953 = vpop.permute.xlu0 %952
          %954 = vrot.lane.b32.xlu0 %v949, 127
          %v955 = vpop.permute.xlu0 %954
          %v958 = vadd.f32 %v944, %v953
          %v959 = vadd.f32 %v945, %v955
          %s960 = sld [smem:[#allocation9 + $0x33]]
          %v961 = vstv %s960
          %v962 = vmul.f32 %v939, %v961
          %v963 = vmul.f32 %v940, %v961
          %966 = vrot.lane.b32.xlu0 %v962, 126
          %v967 = vpop.permute.xlu0 %966
          %968 = vrot.lane.b32.xlu0 %v963, 126
          %v969 = vpop.permute.xlu0 %968
          %v972 = vadd.f32 %v958, %v967
          %v973 = vadd.f32 %v959, %v969
          %s974 = sld [smem:[#allocation9 + $0x34]]
          %v975 = vstv %s974
          %v976 = vmul.f32 %v939, %v975
          %v977 = vmul.f32 %v940, %v975
          %980 = vrot.lane.b32.xlu0 %v976, 125
          %v981 = vpop.permute.xlu0 %980
          %982 = vrot.lane.b32.xlu0 %v977, 125
          %v983 = vpop.permute.xlu0 %982
          %v986 = vadd.f32 %v972, %v981
          %v987 = vadd.f32 %v973, %v983
          %s988 = sld [smem:[#allocation9 + $0x35]]
          %v989 = vstv %s988
          %v990 = vmul.f32 %v939, %v989
          %v991 = vmul.f32 %v940, %v989
          %994 = vrot.lane.b32.xlu0 %v990, 124
          %v995 = vpop.permute.xlu0 %994
          %996 = vrot.lane.b32.xlu0 %v991, 124
          %v997 = vpop.permute.xlu0 %996
          %v1000 = vadd.f32 %v986, %v995
          %v1001 = vadd.f32 %v987, %v997
          %s1002 = sld [smem:[#allocation9 + $0x36]]
          %v1003 = vstv %s1002
          %v1004 = vmul.f32 %v939, %v1003
          %v1005 = vmul.f32 %v940, %v1003
          %1008 = vrot.lane.b32.xlu0 %v1004, 123
          %v1009 = vpop.permute.xlu0 %1008
          %1010 = vrot.lane.b32.xlu0 %v1005, 123
          %v1011 = vpop.permute.xlu0 %1010
          %v1014 = vadd.f32 %v1000, %v1009
          %v1015 = vadd.f32 %v1001, %v1011
          %s1016 = sld [smem:[#allocation9 + $0x37]]
          %v1017 = vstv %s1016
          %v1018 = vmul.f32 %v939, %v1017
          %v1019 = vmul.f32 %v940, %v1017
          %1022 = vrot.lane.b32.xlu0 %v1018, 122
          %v1023 = vpop.permute.xlu0 %1022
          %1024 = vrot.lane.b32.xlu0 %v1019, 122
          %v1025 = vpop.permute.xlu0 %1024
          %v1028 = vadd.f32 %v1014, %v1023
          %v1029 = vadd.f32 %v1015, %v1025
          %s1030 = sld [smem:[#allocation9 + $0x38]]
          %v1031 = vld [vmem:[%s291 + $0x1] sm:$0xff]
          %v1032 = vld [vmem:[%s291 + $0x9] sm:$0xff]
          %v1033 = vstv %s1030
          %v1034 = vmul.f32 %v1031, %v1033
          %v1035 = vmul.f32 %v1032, %v1033
          %v1036 = vadd.f32 %v1028, %v1034
          %v1037 = vadd.f32 %v1029, %v1035
          %s1038 = sld [smem:[#allocation9 + $0x39]]
          %v1039 = vstv %s1038
          %v1040 = vmul.f32 %v1031, %v1039
          %v1041 = vmul.f32 %v1032, %v1039
          %1044 = vrot.lane.b32.xlu0 %v1040, 127
          %v1045 = vpop.permute.xlu0 %1044
          %1046 = vrot.lane.b32.xlu0 %v1041, 127
          %v1047 = vpop.permute.xlu0 %1046
          %v1050 = vadd.f32 %v1036, %v1045
          %v1051 = vadd.f32 %v1037, %v1047
          %s1052 = sld [smem:[#allocation9 + $0x3a]]
          %v1053 = vstv %s1052
          %v1054 = vmul.f32 %v1031, %v1053
          %v1055 = vmul.f32 %v1032, %v1053
          %1058 = vrot.lane.b32.xlu0 %v1054, 126
          %v1059 = vpop.permute.xlu0 %1058
          %1060 = vrot.lane.b32.xlu0 %v1055, 126
          %v1061 = vpop.permute.xlu0 %1060
          %v1064 = vadd.f32 %v1050, %v1059
          %v1065 = vadd.f32 %v1051, %v1061
          %s1066 = sld [smem:[#allocation9 + $0x3b]]
          %v1067 = vstv %s1066
          %v1068 = vmul.f32 %v1031, %v1067
          %v1069 = vmul.f32 %v1032, %v1067
          %1072 = vrot.lane.b32.xlu0 %v1068, 125
          %v1073 = vpop.permute.xlu0 %1072
          %1074 = vrot.lane.b32.xlu0 %v1069, 125
          %v1075 = vpop.permute.xlu0 %1074
          %v1078 = vadd.f32 %v1064, %v1073
          %v1079 = vadd.f32 %v1065, %v1075
          %s1080 = sld [smem:[#allocation9 + $0x3c]]
          %v1081 = vstv %s1080
          %v1082 = vmul.f32 %v1031, %v1081
          %v1083 = vmul.f32 %v1032, %v1081
          %1086 = vrot.lane.b32.xlu0 %v1082, 124
          %v1087 = vpop.permute.xlu0 %1086
          %1088 = vrot.lane.b32.xlu0 %v1083, 124
          %v1089 = vpop.permute.xlu0 %1088
          %v1092 = vadd.f32 %v1078, %v1087
          %v1093 = vadd.f32 %v1079, %v1089
          %s1094 = sld [smem:[#allocation9 + $0x3d]]
          %v1095 = vstv %s1094
          %v1096 = vmul.f32 %v1031, %v1095
          %v1097 = vmul.f32 %v1032, %v1095
          %1100 = vrot.lane.b32.xlu0 %v1096, 123
          %v1101 = vpop.permute.xlu0 %1100
          %1102 = vrot.lane.b32.xlu0 %v1097, 123
          %v1103 = vpop.permute.xlu0 %1102
          %v1106 = vadd.f32 %v1092, %v1101
          %v1107 = vadd.f32 %v1093, %v1103
          %s1108 = sld [smem:[#allocation9 + $0x3e]]
          %v1109 = vstv %s1108
          %v1110 = vmul.f32 %v1031, %v1109
          %v1111 = vmul.f32 %v1032, %v1109
          %1114 = vrot.lane.b32.xlu0 %v1110, 122
          %v1115 = vpop.permute.xlu0 %1114
          %1116 = vrot.lane.b32.xlu0 %v1111, 122
          %v1117 = vpop.permute.xlu0 %1116
          %v1120 = vadd.f32 %v1106, %v1115
          %v1121 = vadd.f32 %v1107, %v1117
          %s1122 = sld [smem:[#allocation9 + $0x3f]]
          %v1123 = vld [vmem:[%s291 + $0x2] sm:$0xff]
          %v1124 = vld [vmem:[%s291 + $0xa] sm:$0xff]
          %v1125 = vstv %s1122
          %v1126 = vmul.f32 %v1123, %v1125
          %v1127 = vmul.f32 %v1124, %v1125
          %v1128 = vadd.f32 %v1120, %v1126
          %v1129 = vadd.f32 %v1121, %v1127
          %s1130 = sld [smem:[#allocation9 + $0x40]]
          %v1131 = vstv %s1130
          %v1132 = vmul.f32 %v1123, %v1131
          %v1133 = vmul.f32 %v1124, %v1131
          %1136 = vrot.lane.b32.xlu0 %v1132, 127
          %v1137 = vpop.permute.xlu0 %1136
          %1138 = vrot.lane.b32.xlu0 %v1133, 127
          %v1139 = vpop.permute.xlu0 %1138
          %v1142 = vadd.f32 %v1128, %v1137
          %v1143 = vadd.f32 %v1129, %v1139
          %s1144 = sld [smem:[#allocation9 + $0x41]]
          %v1145 = vstv %s1144
          %v1146 = vmul.f32 %v1123, %v1145
          %v1147 = vmul.f32 %v1124, %v1145
          %1150 = vrot.lane.b32.xlu0 %v1146, 126
          %v1151 = vpop.permute.xlu0 %1150
          %1152 = vrot.lane.b32.xlu0 %v1147, 126
          %v1153 = vpop.permute.xlu0 %1152
          %v1156 = vadd.f32 %v1142, %v1151
          %v1157 = vadd.f32 %v1143, %v1153
          %s1158 = sld [smem:[#allocation9 + $0x42]]
          %v1159 = vstv %s1158
          %v1160 = vmul.f32 %v1123, %v1159
          %v1161 = vmul.f32 %v1124, %v1159
          %1164 = vrot.lane.b32.xlu0 %v1160, 125
          %v1165 = vpop.permute.xlu0 %1164
          %1166 = vrot.lane.b32.xlu0 %v1161, 125
          %v1167 = vpop.permute.xlu0 %1166
          %v1170 = vadd.f32 %v1156, %v1165
          %v1171 = vadd.f32 %v1157, %v1167
          %s1172 = sld [smem:[#allocation9 + $0x43]]
          %v1173 = vstv %s1172
          %v1174 = vmul.f32 %v1123, %v1173
          %v1175 = vmul.f32 %v1124, %v1173
          %1178 = vrot.lane.b32.xlu0 %v1174, 124
          %v1179 = vpop.permute.xlu0 %1178
          %1180 = vrot.lane.b32.xlu0 %v1175, 124
          %v1181 = vpop.permute.xlu0 %1180
          %v1184 = vadd.f32 %v1170, %v1179
          %v1185 = vadd.f32 %v1171, %v1181
          %s1186 = sld [smem:[#allocation9 + $0x44]]
          %v1187 = vstv %s1186
          %v1188 = vmul.f32 %v1123, %v1187
          %v1189 = vmul.f32 %v1124, %v1187
          %1192 = vrot.lane.b32.xlu0 %v1188, 123
          %v1193 = vpop.permute.xlu0 %1192
          %1194 = vrot.lane.b32.xlu0 %v1189, 123
          %v1195 = vpop.permute.xlu0 %1194
          %v1198 = vadd.f32 %v1184, %v1193
          %v1199 = vadd.f32 %v1185, %v1195
          %s1200 = sld [smem:[#allocation9 + $0x45]]
          %v1201 = vstv %s1200
          %v1202 = vmul.f32 %v1123, %v1201
          %v1203 = vmul.f32 %v1124, %v1201
          %1206 = vrot.lane.b32.xlu0 %v1202, 122
          %v1207 = vpop.permute.xlu0 %1206
          %1208 = vrot.lane.b32.xlu0 %v1203, 122
          %v1209 = vpop.permute.xlu0 %1208
          %v1212 = vadd.f32 %v1198, %v1207
          %v1213 = vadd.f32 %v1199, %v1209
          %s1214 = sld [smem:[#allocation9 + $0x46]]
          %v1215 = vld [vmem:[%s291 + $0x3] sm:$0xff]
          %v1216 = vld [vmem:[%s291 + $0xb] sm:$0xff]
          %v1217 = vstv %s1214
          %v1218 = vmul.f32 %v1215, %v1217
          %v1219 = vmul.f32 %v1216, %v1217
          %v1220 = vadd.f32 %v1212, %v1218
          %v1221 = vadd.f32 %v1213, %v1219
          %s1222 = sld [smem:[#allocation9 + $0x47]]
          %v1223 = vstv %s1222
          %v1224 = vmul.f32 %v1215, %v1223
          %v1225 = vmul.f32 %v1216, %v1223
          %1228 = vrot.lane.b32.xlu0 %v1224, 127
          %v1229 = vpop.permute.xlu0 %1228
          %1230 = vrot.lane.b32.xlu0 %v1225, 127
          %v1231 = vpop.permute.xlu0 %1230
          %v1234 = vadd.f32 %v1220, %v1229
          %v1235 = vadd.f32 %v1221, %v1231
          %s1236 = sld [smem:[#allocation9 + $0x48]]
          %v1237 = vstv %s1236
          %v1238 = vmul.f32 %v1215, %v1237
          %v1239 = vmul.f32 %v1216, %v1237
          %1242 = vrot.lane.b32.xlu0 %v1238, 126
          %v1243 = vpop.permute.xlu0 %1242
          %1244 = vrot.lane.b32.xlu0 %v1239, 126
          %v1245 = vpop.permute.xlu0 %1244
          %v1248 = vadd.f32 %v1234, %v1243
          %v1249 = vadd.f32 %v1235, %v1245
          %s1250 = sld [smem:[#allocation9 + $0x49]]
          %v1251 = vstv %s1250
          %v1252 = vmul.f32 %v1215, %v1251
          %v1253 = vmul.f32 %v1216, %v1251
          %1256 = vrot.lane.b32.xlu0 %v1252, 125
          %v1257 = vpop.permute.xlu0 %1256
          %1258 = vrot.lane.b32.xlu0 %v1253, 125
          %v1259 = vpop.permute.xlu0 %1258
          %v1262 = vadd.f32 %v1248, %v1257
          %v1263 = vadd.f32 %v1249, %v1259
          %s1264 = sld [smem:[#allocation9 + $0x4a]]
          %v1265 = vstv %s1264
          %v1266 = vmul.f32 %v1215, %v1265
          %v1267 = vmul.f32 %v1216, %v1265
          %1270 = vrot.lane.b32.xlu0 %v1266, 124
          %v1271 = vpop.permute.xlu0 %1270
          %1272 = vrot.lane.b32.xlu0 %v1267, 124
          %v1273 = vpop.permute.xlu0 %1272
          %v1276 = vadd.f32 %v1262, %v1271
          %v1277 = vadd.f32 %v1263, %v1273
          %s1278 = sld [smem:[#allocation9 + $0x4b]]
          %v1279 = vstv %s1278
          %v1280 = vmul.f32 %v1215, %v1279
          %v1281 = vmul.f32 %v1216, %v1279
          %1284 = vrot.lane.b32.xlu0 %v1280, 123
          %v1285 = vpop.permute.xlu0 %1284
          %1286 = vrot.lane.b32.xlu0 %v1281, 123
          %v1287 = vpop.permute.xlu0 %1286
          %v1290 = vadd.f32 %v1276, %v1285
          %v1291 = vadd.f32 %v1277, %v1287
          %s1292 = sld [smem:[#allocation9 + $0x4c]]
          %v1293 = vstv %s1292
          %v1294 = vmul.f32 %v1215, %v1293
          %v1295 = vmul.f32 %v1216, %v1293
          %1298 = vrot.lane.b32.xlu0 %v1294, 122
          %v1299 = vpop.permute.xlu0 %1298
          %1300 = vrot.lane.b32.xlu0 %v1295, 122
          %v1301 = vpop.permute.xlu0 %1300
          %v1304 = vadd.f32 %v1290, %v1299
          %v1305 = vadd.f32 %v1291, %v1301
          %s1306 = sld [smem:[#allocation9 + $0x4d]]
          %v1307 = vld [vmem:[%s291 + $0x4] sm:$0xff]
          %v1308 = vld [vmem:[%s291 + $0xc] sm:$0xff]
          %v1309 = vstv %s1306
          %v1310 = vmul.f32 %v1307, %v1309
          %v1311 = vmul.f32 %v1308, %v1309
          %v1312 = vadd.f32 %v1304, %v1310
          %v1313 = vadd.f32 %v1305, %v1311
          %s1314 = sld [smem:[#allocation9 + $0x4e]]
          %v1315 = vstv %s1314
          %v1316 = vmul.f32 %v1307, %v1315
          %v1317 = vmul.f32 %v1308, %v1315
          %1320 = vrot.lane.b32.xlu0 %v1316, 127
          %v1321 = vpop.permute.xlu0 %1320
          %1322 = vrot.lane.b32.xlu0 %v1317, 127
          %v1323 = vpop.permute.xlu0 %1322
          %v1326 = vadd.f32 %v1312, %v1321
          %v1327 = vadd.f32 %v1313, %v1323
          %s1328 = sld [smem:[#allocation9 + $0x4f]]
          %v1329 = vstv %s1328
          %v1330 = vmul.f32 %v1307, %v1329
          %v1331 = vmul.f32 %v1308, %v1329
          %1334 = vrot.lane.b32.xlu0 %v1330, 126
          %v1335 = vpop.permute.xlu0 %1334
          %1336 = vrot.lane.b32.xlu0 %v1331, 126
          %v1337 = vpop.permute.xlu0 %1336
          %v1340 = vadd.f32 %v1326, %v1335
          %v1341 = vadd.f32 %v1327, %v1337
          %s1342 = sld [smem:[#allocation9 + $0x50]]
          %v1343 = vstv %s1342
          %v1344 = vmul.f32 %v1307, %v1343
          %v1345 = vmul.f32 %v1308, %v1343
          %1348 = vrot.lane.b32.xlu0 %v1344, 125
          %v1349 = vpop.permute.xlu0 %1348
          %1350 = vrot.lane.b32.xlu0 %v1345, 125
          %v1351 = vpop.permute.xlu0 %1350
          %v1354 = vadd.f32 %v1340, %v1349
          %v1355 = vadd.f32 %v1341, %v1351
          %s1356 = sld [smem:[#allocation9 + $0x51]]
          %v1357 = vstv %s1356
          %v1358 = vmul.f32 %v1307, %v1357
          %v1359 = vmul.f32 %v1308, %v1357
          %1362 = vrot.lane.b32.xlu0 %v1358, 124
          %v1363 = vpop.permute.xlu0 %1362
          %1364 = vrot.lane.b32.xlu0 %v1359, 124
          %v1365 = vpop.permute.xlu0 %1364
          %v1368 = vadd.f32 %v1354, %v1363
          %v1369 = vadd.f32 %v1355, %v1365
          %s1370 = sld [smem:[#allocation9 + $0x52]]
          %v1371 = vstv %s1370
          %v1372 = vmul.f32 %v1307, %v1371
          %v1373 = vmul.f32 %v1308, %v1371
          %1376 = vrot.lane.b32.xlu0 %v1372, 123
          %v1377 = vpop.permute.xlu0 %1376
          %1378 = vrot.lane.b32.xlu0 %v1373, 123
          %v1379 = vpop.permute.xlu0 %1378
          %v1382 = vadd.f32 %v1368, %v1377
          %v1383 = vadd.f32 %v1369, %v1379
          %s1384 = sld [smem:[#allocation9 + $0x53]]
          %v1385 = vstv %s1384
          %v1386 = vmul.f32 %v1307, %v1385
          %v1387 = vmul.f32 %v1308, %v1385
          %1390 = vrot.lane.b32.xlu0 %v1386, 122
          %v1391 = vpop.permute.xlu0 %1390
          %1392 = vrot.lane.b32.xlu0 %v1387, 122
          %v1393 = vpop.permute.xlu0 %1392
          %v1396 = vadd.f32 %v1382, %v1391
          %v1397 = vadd.f32 %v1383, %v1393
          %s1398 = sld [smem:[#allocation9 + $0x54]]
          %v1399 = vld [vmem:[%s291 + $0x5] sm:$0xff]
          %v1400 = vld [vmem:[%s291 + $0xd] sm:$0xff]
          %v1401 = vstv %s1398
          %v1402 = vmul.f32 %v1399, %v1401
          %v1403 = vmul.f32 %v1400, %v1401
          %v1404 = vadd.f32 %v1396, %v1402
          %v1405 = vadd.f32 %v1397, %v1403
          %s1406 = sld [smem:[#allocation9 + $0x55]]
          %v1407 = vstv %s1406
          %v1408 = vmul.f32 %v1399, %v1407
          %v1409 = vmul.f32 %v1400, %v1407
          %1412 = vrot.lane.b32.xlu0 %v1408, 127
          %v1413 = vpop.permute.xlu0 %1412
          %1414 = vrot.lane.b32.xlu0 %v1409, 127
          %v1415 = vpop.permute.xlu0 %1414
          %v1418 = vadd.f32 %v1404, %v1413
          %v1419 = vadd.f32 %v1405, %v1415
          %s1420 = sld [smem:[#allocation9 + $0x56]]
          %v1421 = vstv %s1420
          %v1422 = vmul.f32 %v1399, %v1421
          %v1423 = vmul.f32 %v1400, %v1421
          %1426 = vrot.lane.b32.xlu0 %v1422, 126
          %v1427 = vpop.permute.xlu0 %1426
          %1428 = vrot.lane.b32.xlu0 %v1423, 126
          %v1429 = vpop.permute.xlu0 %1428
          %v1432 = vadd.f32 %v1418, %v1427
          %v1433 = vadd.f32 %v1419, %v1429
          %s1434 = sld [smem:[#allocation9 + $0x57]]
          %v1435 = vstv %s1434
          %v1436 = vmul.f32 %v1399, %v1435
          %v1437 = vmul.f32 %v1400, %v1435
          %1440 = vrot.lane.b32.xlu0 %v1436, 125
          %v1441 = vpop.permute.xlu0 %1440
          %1442 = vrot.lane.b32.xlu0 %v1437, 125
          %v1443 = vpop.permute.xlu0 %1442
          %v1446 = vadd.f32 %v1432, %v1441
          %v1447 = vadd.f32 %v1433, %v1443
          %s1448 = sld [smem:[#allocation9 + $0x58]]
          %v1449 = vstv %s1448
          %v1450 = vmul.f32 %v1399, %v1449
          %v1451 = vmul.f32 %v1400, %v1449
          %1454 = vrot.lane.b32.xlu0 %v1450, 124
          %v1455 = vpop.permute.xlu0 %1454
          %1456 = vrot.lane.b32.xlu0 %v1451, 124
          %v1457 = vpop.permute.xlu0 %1456
          %v1460 = vadd.f32 %v1446, %v1455
          %v1461 = vadd.f32 %v1447, %v1457
          %s1462 = sld [smem:[#allocation9 + $0x59]]
          %v1463 = vstv %s1462
          %v1464 = vmul.f32 %v1399, %v1463
          %v1465 = vmul.f32 %v1400, %v1463
          %1468 = vrot.lane.b32.xlu0 %v1464, 123
          %v1469 = vpop.permute.xlu0 %1468
          %1470 = vrot.lane.b32.xlu0 %v1465, 123
          %v1471 = vpop.permute.xlu0 %1470
          %v1474 = vadd.f32 %v1460, %v1469
          %v1475 = vadd.f32 %v1461, %v1471
          %s1476 = sld [smem:[#allocation9 + $0x5a]]
          %v1477 = vstv %s1476
          %v1478 = vmul.f32 %v1399, %v1477
          %v1479 = vmul.f32 %v1400, %v1477
          %1482 = vrot.lane.b32.xlu0 %v1478, 122
          %v1483 = vpop.permute.xlu0 %1482
          %1484 = vrot.lane.b32.xlu0 %v1479, 122
          %v1485 = vpop.permute.xlu0 %1484
          %v1488 = vadd.f32 %v1474, %v1483
          %v1489 = vadd.f32 %v1475, %v1485
          %s1490 = sld [smem:[#allocation9 + $0x5b]]
          %v1491 = vld [vmem:[%s291 + $0x6] sm:$0xff]
          %v1492 = vld [vmem:[%s291 + $0xe] sm:$0xff]
          %v1493 = vstv %s1490
          %v1494 = vmul.f32 %v1491, %v1493
          %v1495 = vmul.f32 %v1492, %v1493
          %v1496 = vadd.f32 %v1488, %v1494
          %v1497 = vadd.f32 %v1489, %v1495
          %s1498 = sld [smem:[#allocation9 + $0x5c]]
          %v1499 = vstv %s1498
          %v1500 = vmul.f32 %v1491, %v1499
          %v1501 = vmul.f32 %v1492, %v1499
          %1504 = vrot.lane.b32.xlu0 %v1500, 127
          %v1505 = vpop.permute.xlu0 %1504
          %1506 = vrot.lane.b32.xlu0 %v1501, 127
          %v1507 = vpop.permute.xlu0 %1506
          %v1510 = vadd.f32 %v1496, %v1505
          %v1511 = vadd.f32 %v1497, %v1507
          %s1512 = sld [smem:[#allocation9 + $0x5d]]
          %v1513 = vstv %s1512
          %v1514 = vmul.f32 %v1491, %v1513
          %v1515 = vmul.f32 %v1492, %v1513
          %1518 = vrot.lane.b32.xlu0 %v1514, 126
          %v1519 = vpop.permute.xlu0 %1518
          %1520 = vrot.lane.b32.xlu0 %v1515, 126
          %v1521 = vpop.permute.xlu0 %1520
          %v1524 = vadd.f32 %v1510, %v1519
          %v1525 = vadd.f32 %v1511, %v1521
          %s1526 = sld [smem:[#allocation9 + $0x5e]]
          %v1527 = vstv %s1526
          %v1528 = vmul.f32 %v1491, %v1527
          %v1529 = vmul.f32 %v1492, %v1527
          %1532 = vrot.lane.b32.xlu0 %v1528, 125
          %v1533 = vpop.permute.xlu0 %1532
          %1534 = vrot.lane.b32.xlu0 %v1529, 125
          %v1535 = vpop.permute.xlu0 %1534
          %v1538 = vadd.f32 %v1524, %v1533
          %v1539 = vadd.f32 %v1525, %v1535
          %s1540 = sld [smem:[#allocation9 + $0x5f]]
          %v1541 = vstv %s1540
          %v1542 = vmul.f32 %v1491, %v1541
          %v1543 = vmul.f32 %v1492, %v1541
          %1546 = vrot.lane.b32.xlu0 %v1542, 124
          %v1547 = vpop.permute.xlu0 %1546
          %1548 = vrot.lane.b32.xlu0 %v1543, 124
          %v1549 = vpop.permute.xlu0 %1548
          %v1552 = vadd.f32 %v1538, %v1547
          %v1553 = vadd.f32 %v1539, %v1549
          %s1554 = sld [smem:[#allocation9 + $0x60]]
          %v1555 = vstv %s1554
          %v1556 = vmul.f32 %v1491, %v1555
          %v1557 = vmul.f32 %v1492, %v1555
          %1560 = vrot.lane.b32.xlu0 %v1556, 123
          %v1561 = vpop.permute.xlu0 %1560
          %1562 = vrot.lane.b32.xlu0 %v1557, 123
          %v1563 = vpop.permute.xlu0 %1562
          %v1566 = vadd.f32 %v1552, %v1561
          %v1567 = vadd.f32 %v1553, %v1563
          %s1568 = sld [smem:[#allocation9 + $0x61]]
          %v1569 = vstv %s1568
          %v1570 = vmul.f32 %v1491, %v1569
          %v1571 = vmul.f32 %v1492, %v1569
          %1574 = vrot.lane.b32.xlu0 %v1570, 122
          %v1575 = vpop.permute.xlu0 %1574
          %1576 = vrot.lane.b32.xlu0 %v1571, 122
          %v1577 = vpop.permute.xlu0 %1576
          %v1580 = vadd.f32 %v1566, %v1575
          %v1581 = vadd.f32 %v1567, %v1577
          %v1582 = vxor.u32 %v1580, 2147483648
          %v1583 = vxor.u32 %v1581, 2147483648
          %v1584 = vmul.f32 %v1582, 1.442695
          %v1585 = vpow.pop %v1584
          %v1586 = vmul.f32 %v1583, 1.442695
          %v1587 = vpow.pop %v1586
          %v1588 = vadd.f32 %v1585, 1.0
          %v1589 = vadd.f32 %v1587, 1.0
          %v1590 = vrcp.pop %v1588
          %v1591 = vmul.f32 1.0, %v1590
          %v1592 = vrcp.pop %v1589
          %v1593 = vmul.f32 1.0, %v1592
          %1594 = vst.msk [vmem:[%s192] sm:$0xff] %vm202, %v1591
          %1595 = vst.msk [vmem:[%s192 + $0x8] sm:$0xff] %vm202, %v1593
        $region48: #{tpu_custom_call.1} parent=27 // pred_fallthru
          _
        %s1596 = sand.u32 %s89, 1
        %s1597 = scalar_lea.sflag [#allocation7], %s1596
        %s1598 = sand.u32 %s89, 1
        %s1599 = smul.addr %s1598, 16
        %s1600 = scalar_lea.vmem [#allocation10], %s1599
        // Predicated region
        $region49: #{tpu_custom_call.1} parent=27 // pred_check
          %p1601 = pneg %p99
        $region50: #{tpu_custom_call.1} parent=27 // pred_check_branch
          %1603 = sbr.rel (%p1601) target = $region52
        $region51: #{tpu_custom_call.1} parent=27 // pred_region
          %s1605 = ssub.s32 256, 256
          %1606 = vsyncadd %s1597, %s1605
          %s1607 = smul.addr %s24, 2
          %s1608 = smul.addr %s1607, 128
          %s1609 = scalar_lea.hbm %s2, %s1608
          %s1610 = sshll.u32 %s1600, 4
          %s1611 = int_to_ptr.vmem [resolvable:$true] %s1610
          %1616 = dma.vmem_to_hbm [thread:$0]  %s1611, 256, %s1609, %s1597, 128, 128, 8
        $region52: #{tpu_custom_call.1} parent=27 // pred_fallthru
          _
      $region28: #{tpu_custom_call.1} parent=5 // pred_fallthru
        _
      %p1617 = scmp.le.s32.totalorder 2, %s15
      // Predicated region
      $region53: #{tpu_custom_call.1} parent=5 // pred_check
        %p1618 = pneg %p1617
      $region54: #{tpu_custom_call.1} parent=5 // pred_check_branch
        %1620 = sbr.rel (%p1618) target = $region56
      $region55: #{tpu_custom_call.1} parent=5 // pred_region
        %s1621 = ssub.s32 %s15, 2
        // Predicated region
        $region57: #{tpu_custom_call.1} parent=55 // pred_check
          %p1622 = pneg %p105
        $region58: #{tpu_custom_call.1} parent=55 // pred_check_branch
          %1624 = sbr.rel (%p1622) target = $region60
        $region59: #{tpu_custom_call.1} parent=55 // pred_region
          %s1625 = sand.u32 %s90, 1
          %s1626 = scalar_lea.sflag [#allocation7], %s1625
          %s1627 = sand.u32 %s90, 1
          %s1628 = smul.addr %s1627, 16
          %s1629 = scalar_lea.vmem [#allocation10], %s1628
          %1630 = dma.done %s1626, 256
        $region60: #{tpu_custom_call.1} parent=55 // pred_fallthru
          _
      $region56: #{tpu_custom_call.1} parent=5 // pred_fallthru
        _
    $region6: #{tpu_custom_call.1} parent=1 // loop_footer
      %s19 = sadd.s32 1, %s15
    $region7: #{tpu_custom_call.1} parent=1 // loop_footer_branch
      %14 = sbr.rel target = $region3
    $region8: #{tpu_custom_call.1} parent=1 // loop_exit
      _
    %1631 = vsyncpa [#allocation6], 1
    %s1632 = scalar_lea.sflag [#allocation6], 1
    %1633 = vsyncpa %s1632, 1
    %1634 = vsyncpa [#allocation7], 1
    %s1635 = scalar_lea.sflag [#allocation7], 1
    %1636 = vsyncpa %s1635, 1
    %1637 = vsyncpa [#allocation8], 1
    %s1638 = scalar_lea.sflag [#allocation8], 1
    %1639 = vsyncpa %s1638, 1

</llo_original>
